<compile_context>
chip_gen: v7x
topology: tpu7x:2x2x1
jax: 0.10.0
libtpu: 0.0.40
codegen_flags: <defaults>
</compile_context>

<pallas_src>
import jax
import jax.numpy as jnp
from jax.experimental import pallas as pl
from jax.experimental.pallas import tpu as pltpu

HIDDEN = 128


def _round_up(n, m):
    return ((n + m - 1) // m) * m


def value_net_kernel(x_ref, w1_ref, b1_ref, w2_ref, b2_ref, o_ref):
    # layer 1 on the MXU: (tb, D) @ (D, 128) -> (tb, 128), f32 accumulate
    h = jnp.dot(x_ref[...], w1_ref[...], preferred_element_type=jnp.float32)
    h = jnp.maximum(h + b1_ref[...], 0.0)            # bias (row broadcast) + ReLU on the VPU
    # layer 2 also on the MXU (MXU has slack; keeps the VPU to just the ReLU above)
    v = jnp.dot(h, w2_ref[...], preferred_element_type=jnp.float32)   # (tb, 1)
    o_ref[...] = (v + b2_ref[...]).astype(o_ref.dtype)


def value_network_forward(x, w1, b1, w2, b2, *, block_b=2048):
    """x: (B, obs_dim) f32; w1: (obs_dim, 128); b1: (128,); w2: (128, 1); b2: (1,).
    Returns (B, 1) f32 state values."""
    B, D = x.shape

    if B >= 8:
        # large batch tiles to amortize per-grid-step overhead
        block_b = max(8, (min(block_b, B) // 8) * 8)
        # v7x has 2 TensorCores: keep >=4 "parallel" grid steps when the batch is
        # big enough so the grid shards across both cores (v5e/v6e: 1 TC, keep
        # the largest block).
        kind = jax.devices()[0].device_kind.lower() if jax.devices() else ""
        if "v7" in kind and B >= 64:
            block_b = min(block_b, max(8, _round_up(pl.cdiv(B, 4), 8)))
    else:
        block_b = B
    grid = (pl.cdiv(B, block_b),)

    # weight/bias prep is O(1)-sized; x passes straight through untouched
    b1_row = b1.reshape(1, HIDDEN).astype(jnp.float32)
    w2_col = w2.reshape(HIDDEN, 1).astype(jnp.float32)
    b2_2d = b2.reshape(1, 1).astype(jnp.float32)

    return pl.pallas_call(
        value_net_kernel,
        out_shape=jax.ShapeDtypeStruct((B, 1), jnp.float32),
        grid_spec=pltpu.PrefetchScalarGridSpec(
            num_scalar_prefetch=0,
            grid=grid,
            in_specs=[
                pl.BlockSpec((block_b, D), lambda i: (i, 0)),   # x tile, natural (B, D) layout
                pl.BlockSpec((D, HIDDEN), lambda i: (0, 0)),    # W1 (resident across steps)
                pl.BlockSpec((1, HIDDEN), lambda i: (0, 0)),    # b1 row
                pl.BlockSpec((HIDDEN, 1), lambda i: (0, 0)),    # w2 column
                pl.BlockSpec((1, 1), lambda i: (0, 0)),         # b2
            ],
            out_specs=pl.BlockSpec((block_b, 1), lambda i: (i, 0)),
        ),
        compiler_params=pltpu.CompilerParams(
            dimension_semantics=("parallel",),   # independent batch tiles
        ),
    )(x, w1.astype(jnp.float32), b1_row, w2_col, b2_2d)


def init_params(key, obs_dim):
    """Deterministic init mimicking torch.nn.Linear default U(-1/sqrt(fan_in), 1/sqrt(fan_in))."""
    k1, k2, k3, k4 = jax.random.split(key, 4)
    lim1 = 1.0 / jnp.sqrt(jnp.float32(obs_dim))
    lim2 = 1.0 / jnp.sqrt(jnp.float32(HIDDEN))
    w1 = jax.random.uniform(k1, (obs_dim, HIDDEN), jnp.float32, -lim1, lim1)
    b1 = jax.random.uniform(k2, (HIDDEN,), jnp.float32, -lim1, lim1)
    w2 = jax.random.uniform(k3, (HIDDEN, 1), jnp.float32, -lim2, lim2)
    b2 = jax.random.uniform(k4, (1,), jnp.float32, -lim2, lim2)
    return w1, b1, w2, b2


if __name__ == "__main__":
    key = jax.random.PRNGKey(0)
    k_x, k_p = jax.random.split(key)

    # small CartPole-like observation space
    batch, obs_dim = 1000, 4
    x = jax.random.normal(k_x, (batch, obs_dim), jnp.float32)
    w1, b1, w2, b2 = init_params(k_p, obs_dim)

    # pure-JAX f32 reference (force full-precision reference matmuls)
    hi = jax.lax.Precision.HIGHEST
    ref = jnp.maximum(jnp.dot(x, w1, precision=hi) + b1, 0.0)
    ref = jnp.dot(ref, w2, precision=hi) + b2

    # default config: one (or a few, on v7x) large batch tiles
    out = jax.block_until_ready(value_network_forward(x, w1, b1, w2, b2))
    assert out.shape == (batch, 1)
    assert jnp.allclose(out, ref, atol=1e-4, rtol=1e-4), float(jnp.max(jnp.abs(out - ref)))

    # multi-step grid with a ragged edge block (1000 = 3*320 + 40): exercises the
    # cdiv grid + Pallas edge clipping (no wrapper-side padding anywhere).
    out2 = jax.block_until_ready(
        value_network_forward(x, w1, b1, w2, b2, block_b=320))
    assert out2.shape == (batch, 1)
    assert jnp.allclose(out2, ref, atol=1e-4, rtol=1e-4), float(jnp.max(jnp.abs(out2 - ref)))

    print("KERNEL_OK")
</pallas_src>

<mosaic_0001>
module attributes {stable_mosaic.version = 11 : i64} {
  func.func @value_net_kernel(%arg0: i32, %arg1: memref<1000x4xf32, #tpu.memory_space<vmem>>, %arg2: memref<4x128xf32, #tpu.memory_space<vmem>>, %arg3: memref<1x128xf32, #tpu.memory_space<vmem>>, %arg4: memref<128x1xf32, #tpu.memory_space<vmem>>, %arg5: memref<1x1xf32, #tpu.memory_space<vmem>>, %arg6: memref<1000x1xf32, #tpu.memory_space<vmem>>) attributes {dimension_semantics = [#tpu.dimension_semantics<parallel>], iteration_bounds = array<i64: 1>, scalar_prefetch = 0 : i64, scratch_operands = 0 : i64, tpu.core_type = #tpu.core_type<tc>, window_params = [{transform_indices = @transform_0, window_bounds = array<i64: 1000, 4>}, {pipeline_mode = #tpu.pipeline_mode<synchronous>, transform_indices = @transform_1, window_bounds = array<i64: 4, 128>}, {pipeline_mode = #tpu.pipeline_mode<synchronous>, transform_indices = @transform_2, window_bounds = array<i64: 1, 128>}, {pipeline_mode = #tpu.pipeline_mode<synchronous>, transform_indices = @transform_3, window_bounds = array<i64: 128, 1>}, {pipeline_mode = #tpu.pipeline_mode<synchronous>, transform_indices = @transform_4, window_bounds = array<i64: 1, 1>}, {transform_indices = @transform_5, window_bounds = array<i64: 1000, 1>}]} {
    %c0 = arith.constant 0 : index
    %c0_0 = arith.constant 0 : index
    %0 = vector.load %arg1[%c0, %c0_0] : memref<1000x4xf32, #tpu.memory_space<vmem>>, vector<1000x4xf32>
    %c0_1 = arith.constant 0 : index
    %c0_2 = arith.constant 0 : index
    %1 = vector.load %arg2[%c0_1, %c0_2] : memref<4x128xf32, #tpu.memory_space<vmem>>, vector<4x128xf32>
    %cst = arith.constant dense<0.000000e+00> : vector<1000x128xf32>
    %2 = tpu.matmul %0, %1, %cst {dimension_numbers = #tpu.dot_dimension_numbers<[1], [0], [0], [1], [0, 0, 1, 1], [], []>} : vector<1000x4xf32>, vector<4x128xf32>, vector<1000x128xf32> -> vector<1000x128xf32>
    %c0_3 = arith.constant 0 : index
    %c0_4 = arith.constant 0 : index
    %3 = vector.load %arg3[%c0_3, %c0_4] : memref<1x128xf32, #tpu.memory_space<vmem>>, vector<1x128xf32>
    %4 = vector.broadcast %3 : vector<1x128xf32> to vector<1000x128xf32>
    %5 = arith.addf %2, %4 : vector<1000x128xf32>
    %cst_5 = arith.constant 0.000000e+00 : f32
    %6 = vector.broadcast %cst_5 : f32 to vector<1000x128xf32>
    %7 = arith.maximumf %5, %6 : vector<1000x128xf32>
    %c0_6 = arith.constant 0 : index
    %c0_7 = arith.constant 0 : index
    %8 = vector.load %arg4[%c0_6, %c0_7] : memref<128x1xf32, #tpu.memory_space<vmem>>, vector<128x1xf32>
    %cst_8 = arith.constant dense<0.000000e+00> : vector<1000x1xf32>
    %9 = tpu.matmul %7, %8, %cst_8 {dimension_numbers = #tpu.dot_dimension_numbers<[1], [0], [0], [1], [0, 0, 1, 1], [], []>} : vector<1000x128xf32>, vector<128x1xf32>, vector<1000x1xf32> -> vector<1000x1xf32>
    %c0_9 = arith.constant 0 : index
    %c0_10 = arith.constant 0 : index
    %10 = vector.load %arg5[%c0_9, %c0_10] : memref<1x1xf32, #tpu.memory_space<vmem>>, vector<1x1xf32>
    %11 = vector.broadcast %10 : vector<1x1xf32> to vector<1000x1xf32>
    %12 = arith.addf %9, %11 : vector<1000x1xf32>
    %c0_11 = arith.constant 0 : index
    %c0_12 = arith.constant 0 : index
    %13 = vector.load %arg6[%c0_11, %c0_12] : memref<1000x1xf32, #tpu.memory_space<vmem>>, vector<1000x1xf32>
    tpu.vector_store %arg6[%c0_11, %c0_12], %12 {strides = array<i32>} : memref<1000x1xf32, #tpu.memory_space<vmem>>, vector<1000x1xf32>,
    return
  }
  func.func @transform_0(%arg0: i32) -> (i32, i32) {
    %c0_i32 = arith.constant 0 : i32
    %c0_i32_0 = arith.constant 0 : i32
    return %arg0, %c0_i32 : i32, i32
  }
  func.func @transform_1(%arg0: i32) -> (i32, i32) {
    %c0_i32 = arith.constant 0 : i32
    %c0_i32_0 = arith.constant 0 : i32
    %c0_i32_1 = arith.constant 0 : i32
    return %c0_i32, %c0_i32_0 : i32, i32
  }
  func.func @transform_2(%arg0: i32) -> (i32, i32) {
    %c0_i32 = arith.constant 0 : i32
    %c0_i32_0 = arith.constant 0 : i32
    %c0_i32_1 = arith.constant 0 : i32
    return %c0_i32, %c0_i32_0 : i32, i32
  }
  func.func @transform_3(%arg0: i32) -> (i32, i32) {
    %c0_i32 = arith.constant 0 : i32
    %c0_i32_0 = arith.constant 0 : i32
    %c0_i32_1 = arith.constant 0 : i32
    return %c0_i32, %c0_i32_0 : i32, i32
  }
  func.func @transform_4(%arg0: i32) -> (i32, i32) {
    %c0_i32 = arith.constant 0 : i32
    %c0_i32_0 = arith.constant 0 : i32
    %c0_i32_1 = arith.constant 0 : i32
    return %c0_i32, %c0_i32_0 : i32, i32
  }
  func.func @transform_5(%arg0: i32) -> (i32, i32) {
    %c0_i32 = arith.constant 0 : i32
    %c0_i32_0 = arith.constant 0 : i32
    return %arg0, %c0_i32 : i32, i32
  }
}

</mosaic_0001>

<llo_original>
// kernel: tpu_custom_call.1
$region0: #{tpu_custom_call.1}
  #allocation0 [shape = 'u32[]', space=smem, size = 0x4, offset = 0x4, fixed_abs, tag = 'smem constant byte address 0x4 - core index']
  #allocation1 [shape = 'u32[144,128]{1,0:T(1,128)}', space=vmem, size = 0x12000, scoped, tag = 'internal scratch']
  #allocation2 [shape = 'f32[1,1]{1,0:T(1,128)S(1)}', space=vmem, size = 0x200, scoped, tag = 'scoped memory for tpu_custom_call.1']
  %s0 = inlined_call_operand.vmem [shape: f32[1000,4], index: 0, kind: input, shape index: {}]
  %s1 = inlined_call_operand.vmem [shape: f32[4,128], index: 1, kind: input, shape index: {}]
  %s2 = inlined_call_operand.vmem [shape: f32[1,128], index: 2, kind: input, shape index: {}]
  %s3 = inlined_call_operand.vmem [shape: f32[128,1], index: 3, kind: input, shape index: {}]
  %s4 = inlined_call_operand.<no memory space> [shape: f32[1,1], index: 4, kind: input, shape index: {}]
  %s5 = inlined_call_operand.vmem [shape: f32[1000,1], index: 5, kind: output, shape index: {}]
  %s6 = sld [smem:[#allocation0]]
  $region30: #{tpu_custom_call.1} parent=0
    _
  %s8 = ssub.s32 1, %s6
  %s9 = scalar_select 0, %s8, %s6
  %v10 = vstv %s4
  %11 = vst [vmem:[#allocation2] sm:$0x1] %v10
  // Predicated region
  $region2: #{tpu_custom_call.1} parent=0 // pred_check
    _
  $region3: #{tpu_custom_call.1} parent=0 // pred_check_branch
    %13 = sbr.rel (0) target = $region5
  $region4: #{tpu_custom_call.1} parent=0 // pred_region
    _
  $region5: #{tpu_custom_call.1} parent=0 // pred_fallthru
    _
  // Predicated region
  $region6: #{tpu_custom_call.1} parent=0 // pred_check
    _
  $region7: #{tpu_custom_call.1} parent=0 // pred_check_branch
    %15 = sbr.rel (0) target = $region9
  $region8: #{tpu_custom_call.1} parent=0 // pred_region
    _
  $region9: #{tpu_custom_call.1} parent=0 // pred_fallthru
    _
  // Predicated region
  $region10: #{tpu_custom_call.1} parent=0 // pred_check
    _
  $region11: #{tpu_custom_call.1} parent=0 // pred_check_branch
    %17 = sbr.rel (0) target = $region13
  $region12: #{tpu_custom_call.1} parent=0 // pred_region
    _
  $region13: #{tpu_custom_call.1} parent=0 // pred_fallthru
    _
  // Predicated region
  $region14: #{tpu_custom_call.1} parent=0 // pred_check
    _
  $region15: #{tpu_custom_call.1} parent=0 // pred_check_branch
    %19 = sbr.rel (0) target = $region17
  $region16: #{tpu_custom_call.1} parent=0 // pred_region
    _
  $region17: #{tpu_custom_call.1} parent=0 // pred_fallthru
    _
  // Predicated region
  $region18: #{tpu_custom_call.1} parent=0 // pred_check
    _
  $region19: #{tpu_custom_call.1} parent=0 // pred_check_branch
    %21 = sbr.rel (0) target = $region21
  $region20: #{tpu_custom_call.1} parent=0 // pred_region
    _
  $region21: #{tpu_custom_call.1} parent=0 // pred_fallthru
    _
  %v22 = vld [vmem:[%s0] sm:$0xff]
  %v23 = vld [vmem:[%s0 + $0x8] sm:$0xff]
  %v24 = vld [vmem:[%s0 + $0x10] sm:$0xff]
  %v25 = vld [vmem:[%s0 + $0x18] sm:$0xff]
  %v26 = vld [vmem:[%s0 + $0x20] sm:$0xff]
  %v27 = vld [vmem:[%s0 + $0x28] sm:$0xff]
  %v28 = vld [vmem:[%s0 + $0x30] sm:$0xff]
  %v29 = vld [vmem:[%s0 + $0x38] sm:$0xff]
  %v30 = vld [vmem:[%s0 + $0x40] sm:$0xff]
  %v31 = vld [vmem:[%s0 + $0x48] sm:$0xff]
  %v32 = vld [vmem:[%s0 + $0x50] sm:$0xff]
  %v33 = vld [vmem:[%s0 + $0x58] sm:$0xff]
  %v34 = vld [vmem:[%s0 + $0x60] sm:$0xff]
  %v35 = vld [vmem:[%s0 + $0x68] sm:$0xff]
  %v36 = vld [vmem:[%s0 + $0x70] sm:$0xff]
  %v37 = vld [vmem:[%s0 + $0x78] sm:$0xff]
  %v38 = vld [vmem:[%s0 + $0x80] sm:$0xff]
  %v39 = vld [vmem:[%s0 + $0x88] sm:$0xff]
  %v40 = vld [vmem:[%s0 + $0x90] sm:$0xff]
  %v41 = vld [vmem:[%s0 + $0x98] sm:$0xff]
  %v42 = vld [vmem:[%s0 + $0xa0] sm:$0xff]
  %v43 = vld [vmem:[%s0 + $0xa8] sm:$0xff]
  %v44 = vld [vmem:[%s0 + $0xb0] sm:$0xff]
  %v45 = vld [vmem:[%s0 + $0xb8] sm:$0xff]
  %v46 = vld [vmem:[%s0 + $0xc0] sm:$0xff]
  %v47 = vld [vmem:[%s0 + $0xc8] sm:$0xff]
  %v48 = vld [vmem:[%s0 + $0xd0] sm:$0xff]
  %v49 = vld [vmem:[%s0 + $0xd8] sm:$0xff]
  %v50 = vld [vmem:[%s0 + $0xe0] sm:$0xff]
  %v51 = vld [vmem:[%s0 + $0xe8] sm:$0xff]
  %v52 = vld [vmem:[%s0 + $0xf0] sm:$0xff]
  %v53 = vld [vmem:[%s0 + $0xf8] sm:$0xff]
  %v54 = vld [vmem:[%s0 + $0x100] sm:$0xff]
  %v55 = vld [vmem:[%s0 + $0x108] sm:$0xff]
  %v56 = vld [vmem:[%s0 + $0x110] sm:$0xff]
  %v57 = vld [vmem:[%s0 + $0x118] sm:$0xff]
  %v58 = vld [vmem:[%s0 + $0x120] sm:$0xff]
  %v59 = vld [vmem:[%s0 + $0x128] sm:$0xff]
  %v60 = vld [vmem:[%s0 + $0x130] sm:$0xff]
  %v61 = vld [vmem:[%s0 + $0x138] sm:$0xff]
  %v62 = vld [vmem:[%s0 + $0x140] sm:$0xff]
  %v63 = vld [vmem:[%s0 + $0x148] sm:$0xff]
  %v64 = vld [vmem:[%s0 + $0x150] sm:$0xff]
  %v65 = vld [vmem:[%s0 + $0x158] sm:$0xff]
  %v66 = vld [vmem:[%s0 + $0x160] sm:$0xff]
  %v67 = vld [vmem:[%s0 + $0x168] sm:$0xff]
  %v68 = vld [vmem:[%s0 + $0x170] sm:$0xff]
  %v69 = vld [vmem:[%s0 + $0x178] sm:$0xff]
  %v70 = vld [vmem:[%s0 + $0x180] sm:$0xff]
  %v71 = vld [vmem:[%s0 + $0x188] sm:$0xff]
  %v72 = vld [vmem:[%s0 + $0x190] sm:$0xff]
  %v73 = vld [vmem:[%s0 + $0x198] sm:$0xff]
  %v74 = vld [vmem:[%s0 + $0x1a0] sm:$0xff]
  %v75 = vld [vmem:[%s0 + $0x1a8] sm:$0xff]
  %v76 = vld [vmem:[%s0 + $0x1b0] sm:$0xff]
  %v77 = vld [vmem:[%s0 + $0x1b8] sm:$0xff]
  %v78 = vld [vmem:[%s0 + $0x1c0] sm:$0xff]
  %v79 = vld [vmem:[%s0 + $0x1c8] sm:$0xff]
  %v80 = vld [vmem:[%s0 + $0x1d0] sm:$0xff]
  %v81 = vld [vmem:[%s0 + $0x1d8] sm:$0xff]
  %v82 = vld [vmem:[%s0 + $0x1e0] sm:$0xff]
  %v83 = vld [vmem:[%s0 + $0x1e8] sm:$0xff]
  %v84 = vld [vmem:[%s0 + $0x1f0] sm:$0xff]
  %v85 = vld [vmem:[%s0 + $0x1f8] sm:$0xff]
  %v86 = vld [vmem:[%s0 + $0x200] sm:$0xff]
  %v87 = vld [vmem:[%s0 + $0x208] sm:$0xff]
  %v88 = vld [vmem:[%s0 + $0x210] sm:$0xff]
  %v89 = vld [vmem:[%s0 + $0x218] sm:$0xff]
  %v90 = vld [vmem:[%s0 + $0x220] sm:$0xff]
  %v91 = vld [vmem:[%s0 + $0x228] sm:$0xff]
  %v92 = vld [vmem:[%s0 + $0x230] sm:$0xff]
  %v93 = vld [vmem:[%s0 + $0x238] sm:$0xff]
  %v94 = vld [vmem:[%s0 + $0x240] sm:$0xff]
  %v95 = vld [vmem:[%s0 + $0x248] sm:$0xff]
  %v96 = vld [vmem:[%s0 + $0x250] sm:$0xff]
  %v97 = vld [vmem:[%s0 + $0x258] sm:$0xff]
  %v98 = vld [vmem:[%s0 + $0x260] sm:$0xff]
  %v99 = vld [vmem:[%s0 + $0x268] sm:$0xff]
  %v100 = vld [vmem:[%s0 + $0x270] sm:$0xff]
  %v101 = vld [vmem:[%s0 + $0x278] sm:$0xff]
  %v102 = vld [vmem:[%s0 + $0x280] sm:$0xff]
  %v103 = vld [vmem:[%s0 + $0x288] sm:$0xff]
  %v104 = vld [vmem:[%s0 + $0x290] sm:$0xff]
  %v105 = vld [vmem:[%s0 + $0x298] sm:$0xff]
  %v106 = vld [vmem:[%s0 + $0x2a0] sm:$0xff]
  %v107 = vld [vmem:[%s0 + $0x2a8] sm:$0xff]
  %v108 = vld [vmem:[%s0 + $0x2b0] sm:$0xff]
  %v109 = vld [vmem:[%s0 + $0x2b8] sm:$0xff]
  %v110 = vld [vmem:[%s0 + $0x2c0] sm:$0xff]
  %v111 = vld [vmem:[%s0 + $0x2c8] sm:$0xff]
  %v112 = vld [vmem:[%s0 + $0x2d0] sm:$0xff]
  %v113 = vld [vmem:[%s0 + $0x2d8] sm:$0xff]
  %v114 = vld [vmem:[%s0 + $0x2e0] sm:$0xff]
  %v115 = vld [vmem:[%s0 + $0x2e8] sm:$0xff]
  %v116 = vld [vmem:[%s0 + $0x2f0] sm:$0xff]
  %v117 = vld [vmem:[%s0 + $0x2f8] sm:$0xff]
  %v118 = vld [vmem:[%s0 + $0x300] sm:$0xff]
  %v119 = vld [vmem:[%s0 + $0x308] sm:$0xff]
  %v120 = vld [vmem:[%s0 + $0x310] sm:$0xff]
  %v121 = vld [vmem:[%s0 + $0x318] sm:$0xff]
  %v122 = vld [vmem:[%s0 + $0x320] sm:$0xff]
  %v123 = vld [vmem:[%s0 + $0x328] sm:$0xff]
  %v124 = vld [vmem:[%s0 + $0x330] sm:$0xff]
  %v125 = vld [vmem:[%s0 + $0x338] sm:$0xff]
  %v126 = vld [vmem:[%s0 + $0x340] sm:$0xff]
  %v127 = vld [vmem:[%s0 + $0x348] sm:$0xff]
  %v128 = vld [vmem:[%s0 + $0x350] sm:$0xff]
  %v129 = vld [vmem:[%s0 + $0x358] sm:$0xff]
  %v130 = vld [vmem:[%s0 + $0x360] sm:$0xff]
  %v131 = vld [vmem:[%s0 + $0x368] sm:$0xff]
  %v132 = vld [vmem:[%s0 + $0x370] sm:$0xff]
  %v133 = vld [vmem:[%s0 + $0x378] sm:$0xff]
  %v134 = vld [vmem:[%s0 + $0x380] sm:$0xff]
  %v135 = vld [vmem:[%s0 + $0x388] sm:$0xff]
  %v136 = vld [vmem:[%s0 + $0x390] sm:$0xff]
  %v137 = vld [vmem:[%s0 + $0x398] sm:$0xff]
  %v138 = vld [vmem:[%s0 + $0x3a0] sm:$0xff]
  %v139 = vld [vmem:[%s0 + $0x3a8] sm:$0xff]
  %v140 = vld [vmem:[%s0 + $0x3b0] sm:$0xff]
  %v141 = vld [vmem:[%s0 + $0x3b8] sm:$0xff]
  %v142 = vld [vmem:[%s0 + $0x3c0] sm:$0xff]
  %v143 = vld [vmem:[%s0 + $0x3c8] sm:$0xff]
  %v144 = vld [vmem:[%s0 + $0x3d0] sm:$0xff]
  %v145 = vld [vmem:[%s0 + $0x3d8] sm:$0xff]
  %v146 = vld [vmem:[%s0 + $0x3e0] sm:$0xff]
  %v147 = vld [vmem:[%s1] sm:$0xf]
  %v148 = vld [vmem:[%s2] sm:$0x1]
  %v150 = vlaneseq
  %v151 = vshrl.u32 %v150, 7
  %v152 = vsub.s32 0, %v151
  %v153 = vrot.slane %v148, %v152
  %vm155 = vcmask 31744
  %v157 = vsel %vm155, %v22, 0
  %v160 = vsel %vm155, %v23, 0
  %v163 = vsel %vm155, %v24, 0
  %v166 = vsel %vm155, %v25, 0
  %v169 = vsel %vm155, %v26, 0
  %v172 = vsel %vm155, %v27, 0
  %v175 = vsel %vm155, %v28, 0
  %v178 = vsel %vm155, %v29, 0
  %v181 = vsel %vm155, %v30, 0
  %v184 = vsel %vm155, %v31, 0
  %v187 = vsel %vm155, %v32, 0
  %v190 = vsel %vm155, %v33, 0
  %v193 = vsel %vm155, %v34, 0
  %v196 = vsel %vm155, %v35, 0
  %v199 = vsel %vm155, %v36, 0
  %v202 = vsel %vm155, %v37, 0
  %v205 = vsel %vm155, %v38, 0
  %v208 = vsel %vm155, %v39, 0
  %v211 = vsel %vm155, %v40, 0
  %v214 = vsel %vm155, %v41, 0
  %v217 = vsel %vm155, %v42, 0
  %v220 = vsel %vm155, %v43, 0
  %v223 = vsel %vm155, %v44, 0
  %v226 = vsel %vm155, %v45, 0
  %v229 = vsel %vm155, %v46, 0
  %v232 = vsel %vm155, %v47, 0
  %v235 = vsel %vm155, %v48, 0
  %v238 = vsel %vm155, %v49, 0
  %v241 = vsel %vm155, %v50, 0
  %v244 = vsel %vm155, %v51, 0
  %v247 = vsel %vm155, %v52, 0
  %v250 = vsel %vm155, %v53, 0
  %v253 = vsel %vm155, %v54, 0
  %v256 = vsel %vm155, %v55, 0
  %v259 = vsel %vm155, %v56, 0
  %v262 = vsel %vm155, %v57, 0
  %v265 = vsel %vm155, %v58, 0
  %v268 = vsel %vm155, %v59, 0
  %v271 = vsel %vm155, %v60, 0
  %v274 = vsel %vm155, %v61, 0
  %v277 = vsel %vm155, %v62, 0
  %v280 = vsel %vm155, %v63, 0
  %v283 = vsel %vm155, %v64, 0
  %v286 = vsel %vm155, %v65, 0
  %v289 = vsel %vm155, %v66, 0
  %v292 = vsel %vm155, %v67, 0
  %v295 = vsel %vm155, %v68, 0
  %v298 = vsel %vm155, %v69, 0
  %v301 = vsel %vm155, %v70, 0
  %v304 = vsel %vm155, %v71, 0
  %v307 = vsel %vm155, %v72, 0
  %v310 = vsel %vm155, %v73, 0
  %v313 = vsel %vm155, %v74, 0
  %v316 = vsel %vm155, %v75, 0
  %v319 = vsel %vm155, %v76, 0
  %v322 = vsel %vm155, %v77, 0
  %v325 = vsel %vm155, %v78, 0
  %v328 = vsel %vm155, %v79, 0
  %v331 = vsel %vm155, %v80, 0
  %v334 = vsel %vm155, %v81, 0
  %v337 = vsel %vm155, %v82, 0
  %v340 = vsel %vm155, %v83, 0
  %v343 = vsel %vm155, %v84, 0
  %v346 = vsel %vm155, %v85, 0
  %v349 = vsel %vm155, %v86, 0
  %v352 = vsel %vm155, %v87, 0
  %v355 = vsel %vm155, %v88, 0
  %v358 = vsel %vm155, %v89, 0
  %v361 = vsel %vm155, %v90, 0
  %v364 = vsel %vm155, %v91, 0
  %v367 = vsel %vm155, %v92, 0
  %v370 = vsel %vm155, %v93, 0
  %v373 = vsel %vm155, %v94, 0
  %v376 = vsel %vm155, %v95, 0
  %v379 = vsel %vm155, %v96, 0
  %v382 = vsel %vm155, %v97, 0
  %v385 = vsel %vm155, %v98, 0
  %v388 = vsel %vm155, %v99, 0
  %v391 = vsel %vm155, %v100, 0
  %v394 = vsel %vm155, %v101, 0
  %v397 = vsel %vm155, %v102, 0
  %v400 = vsel %vm155, %v103, 0
  %v403 = vsel %vm155, %v104, 0
  %v406 = vsel %vm155, %v105, 0
  %v409 = vsel %vm155, %v106, 0
  %v412 = vsel %vm155, %v107, 0
  %v415 = vsel %vm155, %v108, 0
  %v418 = vsel %vm155, %v109, 0
  %v421 = vsel %vm155, %v110, 0
  %v424 = vsel %vm155, %v111, 0
  %v427 = vsel %vm155, %v112, 0
  %v430 = vsel %vm155, %v113, 0
  %v433 = vsel %vm155, %v114, 0
  %v436 = vsel %vm155, %v115, 0
  %v439 = vsel %vm155, %v116, 0
  %v442 = vsel %vm155, %v117, 0
  %v445 = vsel %vm155, %v118, 0
  %v448 = vsel %vm155, %v119, 0
  %v451 = vsel %vm155, %v120, 0
  %v454 = vsel %vm155, %v121, 0
  %v457 = vsel %vm155, %v122, 0
  %v460 = vsel %vm155, %v123, 0
  %v463 = vsel %vm155, %v124, 0
  %v466 = vsel %vm155, %v125, 0
  %v469 = vsel %vm155, %v126, 0
  %v472 = vsel %vm155, %v127, 0
  %v475 = vsel %vm155, %v128, 0
  %v478 = vsel %vm155, %v129, 0
  %v481 = vsel %vm155, %v130, 0
  %v484 = vsel %vm155, %v131, 0
  %v487 = vsel %vm155, %v132, 0
  %v490 = vsel %vm155, %v133, 0
  %v493 = vsel %vm155, %v134, 0
  %v496 = vsel %vm155, %v135, 0
  %v499 = vsel %vm155, %v136, 0
  %v502 = vsel %vm155, %v137, 0
  %v505 = vsel %vm155, %v138, 0
  %v508 = vsel %vm155, %v139, 0
  %v511 = vsel %vm155, %v140, 0
  %v514 = vsel %vm155, %v141, 0
  %v517 = vsel %vm155, %v142, 0
  %v520 = vsel %vm155, %v143, 0
  %v523 = vsel %vm155, %v144, 0
  %v526 = vsel %vm155, %v145, 0
  %v529 = vsel %vm155, %v146, 0
  %vm531 = vcmask 1043456
  %v533 = vsel %vm531, %v147, 0
  %535 = vmatprep.subr.mxu0 0.0
  %536 = vmatpush1.msra.mxu0 %v533
  %537 = vmatprep.subr.mxu0 0.0
  %538 = vmatpush1.msra.mxu0 0.0
  %539 = vmatprep.subr.mxu0 0.0
  %540 = vmatpush1.msra.mxu0 0.0
  %541 = vmatprep.subr.mxu0 0.0
  %542 = vmatpush1.msra.mxu0 0.0
  %543 = vmatprep.subr.mxu0 0.0
  %544 = vmatpush1.msra.mxu0 0.0
  %545 = vmatprep.subr.mxu0 0.0
  %546 = vmatpush1.msra.mxu0 0.0
  %547 = vmatprep.subr.mxu0 0.0
  %548 = vmatpush1.msra.mxu0 0.0
  %549 = vmatprep.subr.mxu0 0.0
  %550 = vmatpush1.msra.mxu0 0.0
  %551 = vmatprep.subr.mxu0 0.0
  %552 = vmatpush1.msra.mxu0 0.0
  %553 = vmatprep.subr.mxu0 0.0
  %554 = vmatpush1.msra.mxu0 0.0
  %555 = vmatprep.subr.mxu0 0.0
  %556 = vmatpush1.msra.mxu0 0.0
  %557 = vmatprep.subr.mxu0 0.0
  %558 = vmatpush1.msra.mxu0 0.0
  %559 = vmatprep.subr.mxu0 0.0
  %560 = vmatpush1.msra.mxu0 0.0
  %561 = vmatprep.subr.mxu0 0.0
  %562 = vmatpush1.msra.mxu0 0.0
  %563 = vmatprep.subr.mxu0 0.0
  %564 = vmatpush1.msra.mxu0 0.0
  %565 = vmatprep.subr.mxu0 0.0
  %566 = vmatpush1.msra.mxu0 0.0
  %567 = vmatprep.subr.mxu0 0.0
  %568 = vmatpush1.msra.mxu0 0.0
  %569 = vmatprep.subr.mxu0 0.0
  %570 = vmatpush1.msra.mxu0 0.0
  %571 = vmatprep.subr.mxu0 0.0
  %572 = vmatpush1.msra.mxu0 0.0
  %573 = vmatprep.subr.mxu0 0.0
  %574 = vmatpush1.msra.mxu0 0.0
  %575 = vmatprep.subr.mxu0 0.0
  %576 = vmatpush1.msra.mxu0 0.0
  %577 = vmatprep.subr.mxu0 0.0
  %578 = vmatpush1.msra.mxu0 0.0
  %579 = vmatprep.subr.mxu0 0.0
  %580 = vmatpush1.msra.mxu0 0.0
  %581 = vmatprep.subr.mxu0 0.0
  %582 = vmatpush1.msra.mxu0 0.0
  %583 = vmatprep.subr.mxu0 0.0
  %584 = vmatpush1.msra.mxu0 0.0
  %585 = vmatprep.subr.mxu0 0.0
  %586 = vmatpush1.msra.mxu0 0.0
  %587 = vmatprep.subr.mxu0 0.0
  %588 = vmatpush1.msra.mxu0 0.0
  %589 = vmatprep.subr.mxu0 0.0
  %590 = vmatpush1.msra.mxu0 0.0
  %591 = vmatprep.subr.mxu0 0.0
  %592 = vmatpush1.msra.mxu0 0.0
  %593 = vmatprep.subr.mxu0 0.0
  %594 = vmatpush1.msra.mxu0 0.0
  %595 = vmatprep.subr.mxu0 0.0
  %596 = vmatpush1.msra.mxu0 0.0
  %597 = vmatprep.subr.mxu0 0.0
  %598 = vmatpush1.msra.mxu0 0.0
  %599 = vmatprep.mubr.f32.mxu0 0.0
  %600 = vmatmul.mubr.f32.gmra.mrb[0].mxu0 %v157
  %v601 = vpop.f32.mrb[0].mxu0
  %v602 = vadd.f32 %v153, %v601
  %v603 = vpop.f32.mrb[0].mxu0
  %604 = vmatprep.mubr.f32.mxu0 0.0
  %605 = vmatmul.mubr.f32.gmra.mrb[0].mxu0 %v160
  %v606 = vpop.f32.mrb[0].mxu0
  %v607 = vadd.f32 %v153, %v606
  %v608 = vpop.f32.mrb[0].mxu0
  %609 = vmatprep.mubr.f32.mxu0 0.0
  %610 = vmatmul.mubr.f32.gmra.mrb[0].mxu0 %v163
  %v611 = vpop.f32.mrb[0].mxu0
  %v612 = vadd.f32 %v153, %v611
  %v613 = vpop.f32.mrb[0].mxu0
  %614 = vmatprep.mubr.f32.mxu0 0.0
  %615 = vmatmul.mubr.f32.gmra.mrb[0].mxu0 %v166
  %v616 = vpop.f32.mrb[0].mxu0
  %v617 = vadd.f32 %v153, %v616
  %v618 = vpop.f32.mrb[0].mxu0
  %619 = vmatprep.mubr.f32.mxu0 0.0
  %620 = vmatmul.mubr.f32.gmra.mrb[0].mxu0 %v169
  %v621 = vpop.f32.mrb[0].mxu0
  %v622 = vadd.f32 %v153, %v621
  %v623 = vpop.f32.mrb[0].mxu0
  %624 = vmatprep.mubr.f32.mxu0 0.0
  %625 = vmatmul.mubr.f32.gmra.mrb[0].mxu0 %v172
  %v626 = vpop.f32.mrb[0].mxu0
  %v627 = vadd.f32 %v153, %v626
  %v628 = vpop.f32.mrb[0].mxu0
  %629 = vmatprep.mubr.f32.mxu0 0.0
  %630 = vmatmul.mubr.f32.gmra.mrb[0].mxu0 %v175
  %v631 = vpop.f32.mrb[0].mxu0
  %v632 = vadd.f32 %v153, %v631
  %v633 = vpop.f32.mrb[0].mxu0
  %634 = vmatprep.mubr.f32.mxu0 0.0
  %635 = vmatmul.mubr.f32.gmra.mrb[0].mxu0 %v178
  %v636 = vpop.f32.mrb[0].mxu0
  %v637 = vadd.f32 %v153, %v636
  %v638 = vpop.f32.mrb[0].mxu0
  %639 = vmatprep.mubr.f32.mxu0 0.0
  %640 = vmatmul.mubr.f32.gmra.mrb[0].mxu0 %v181
  %v641 = vpop.f32.mrb[0].mxu0
  %v642 = vadd.f32 %v153, %v641
  %v643 = vpop.f32.mrb[0].mxu0
  %644 = vmatprep.mubr.f32.mxu0 0.0
  %645 = vmatmul.mubr.f32.gmra.mrb[0].mxu0 %v184
  %v646 = vpop.f32.mrb[0].mxu0
  %v647 = vadd.f32 %v153, %v646
  %v648 = vpop.f32.mrb[0].mxu0
  %649 = vmatprep.mubr.f32.mxu0 0.0
  %650 = vmatmul.mubr.f32.gmra.mrb[0].mxu0 %v187
  %v651 = vpop.f32.mrb[0].mxu0
  %v652 = vadd.f32 %v153, %v651
  %v653 = vpop.f32.mrb[0].mxu0
  %654 = vmatprep.mubr.f32.mxu0 0.0
  %655 = vmatmul.mubr.f32.gmra.mrb[0].mxu0 %v190
  %v656 = vpop.f32.mrb[0].mxu0
  %v657 = vadd.f32 %v153, %v656
  %v658 = vpop.f32.mrb[0].mxu0
  %659 = vmatprep.mubr.f32.mxu0 0.0
  %660 = vmatmul.mubr.f32.gmra.mrb[0].mxu0 %v193
  %v661 = vpop.f32.mrb[0].mxu0
  %v662 = vadd.f32 %v153, %v661
  %v663 = vpop.f32.mrb[0].mxu0
  %664 = vmatprep.mubr.f32.mxu0 0.0
  %665 = vmatmul.mubr.f32.gmra.mrb[0].mxu0 %v196
  %v666 = vpop.f32.mrb[0].mxu0
  %v667 = vadd.f32 %v153, %v666
  %v668 = vpop.f32.mrb[0].mxu0
  %669 = vmatprep.mubr.f32.mxu0 0.0
  %670 = vmatmul.mubr.f32.gmra.mrb[0].mxu0 %v199
  %v671 = vpop.f32.mrb[0].mxu0
  %v672 = vadd.f32 %v153, %v671
  %v673 = vpop.f32.mrb[0].mxu0
  %674 = vmatprep.mubr.f32.mxu0 0.0
  %675 = vmatmul.mubr.f32.gmra.mrb[0].mxu0 %v202
  %v676 = vpop.f32.mrb[0].mxu0
  %v677 = vadd.f32 %v153, %v676
  %v678 = vpop.f32.mrb[0].mxu0
  %679 = vmatprep.mubr.f32.mxu0 0.0
  %680 = vmatmul.mubr.f32.gmra.mrb[0].mxu0 %v205
  %v681 = vpop.f32.mrb[0].mxu0
  %v682 = vadd.f32 %v153, %v681
  %v683 = vpop.f32.mrb[0].mxu0
  %684 = vmatprep.mubr.f32.mxu0 0.0
  %685 = vmatmul.mubr.f32.gmra.mrb[0].mxu0 %v208
  %v686 = vpop.f32.mrb[0].mxu0
  %v687 = vadd.f32 %v153, %v686
  %v688 = vpop.f32.mrb[0].mxu0
  %689 = vmatprep.mubr.f32.mxu0 0.0
  %690 = vmatmul.mubr.f32.gmra.mrb[0].mxu0 %v211
  %v691 = vpop.f32.mrb[0].mxu0
  %v692 = vadd.f32 %v153, %v691
  %v693 = vpop.f32.mrb[0].mxu0
  %694 = vmatprep.mubr.f32.mxu0 0.0
  %695 = vmatmul.mubr.f32.gmra.mrb[0].mxu0 %v214
  %v696 = vpop.f32.mrb[0].mxu0
  %v697 = vadd.f32 %v153, %v696
  %v698 = vpop.f32.mrb[0].mxu0
  %699 = vmatprep.mubr.f32.mxu0 0.0
  %700 = vmatmul.mubr.f32.gmra.mrb[0].mxu0 %v217
  %v701 = vpop.f32.mrb[0].mxu0
  %v702 = vadd.f32 %v153, %v701
  %v703 = vpop.f32.mrb[0].mxu0
  %704 = vmatprep.mubr.f32.mxu0 0.0
  %705 = vmatmul.mubr.f32.gmra.mrb[0].mxu0 %v220
  %v706 = vpop.f32.mrb[0].mxu0
  %v707 = vadd.f32 %v153, %v706
  %v708 = vpop.f32.mrb[0].mxu0
  %709 = vmatprep.mubr.f32.mxu0 0.0
  %710 = vmatmul.mubr.f32.gmra.mrb[0].mxu0 %v223
  %v711 = vpop.f32.mrb[0].mxu0
  %v712 = vadd.f32 %v153, %v711
  %v713 = vpop.f32.mrb[0].mxu0
  %714 = vmatprep.mubr.f32.mxu0 0.0
  %715 = vmatmul.mubr.f32.gmra.mrb[0].mxu0 %v226
  %v716 = vpop.f32.mrb[0].mxu0
  %v717 = vadd.f32 %v153, %v716
  %v718 = vpop.f32.mrb[0].mxu0
  %719 = vmatprep.mubr.f32.mxu0 0.0
  %720 = vmatmul.mubr.f32.gmra.mrb[0].mxu0 %v229
  %v721 = vpop.f32.mrb[0].mxu0
  %v722 = vadd.f32 %v153, %v721
  %v723 = vpop.f32.mrb[0].mxu0
  %724 = vmatprep.mubr.f32.mxu0 0.0
  %725 = vmatmul.mubr.f32.gmra.mrb[0].mxu0 %v232
  %v726 = vpop.f32.mrb[0].mxu0
  %v727 = vadd.f32 %v153, %v726
  %v728 = vpop.f32.mrb[0].mxu0
  %729 = vmatprep.mubr.f32.mxu0 0.0
  %730 = vmatmul.mubr.f32.gmra.mrb[0].mxu0 %v235
  %v731 = vpop.f32.mrb[0].mxu0
  %v732 = vadd.f32 %v153, %v731
  %v733 = vpop.f32.mrb[0].mxu0
  %734 = vmatprep.mubr.f32.mxu0 0.0
  %735 = vmatmul.mubr.f32.gmra.mrb[0].mxu0 %v238
  %v736 = vpop.f32.mrb[0].mxu0
  %v737 = vadd.f32 %v153, %v736
  %v738 = vpop.f32.mrb[0].mxu0
  %739 = vmatprep.mubr.f32.mxu0 0.0
  %740 = vmatmul.mubr.f32.gmra.mrb[0].mxu0 %v241
  %v741 = vpop.f32.mrb[0].mxu0
  %v742 = vadd.f32 %v153, %v741
  %v743 = vpop.f32.mrb[0].mxu0
  %744 = vmatprep.mubr.f32.mxu0 0.0
  %745 = vmatmul.mubr.f32.gmra.mrb[0].mxu0 %v244
  %v746 = vpop.f32.mrb[0].mxu0
  %v747 = vadd.f32 %v153, %v746
  %v748 = vpop.f32.mrb[0].mxu0
  %749 = vmatprep.mubr.f32.mxu0 0.0
  %750 = vmatmul.mubr.f32.gmra.mrb[0].mxu0 %v247
  %v751 = vpop.f32.mrb[0].mxu0
  %v752 = vadd.f32 %v153, %v751
  %v753 = vpop.f32.mrb[0].mxu0
  %754 = vmatprep.mubr.f32.mxu0 0.0
  %755 = vmatmul.mubr.f32.gmra.mrb[0].mxu0 %v250
  %v756 = vpop.f32.mrb[0].mxu0
  %v757 = vadd.f32 %v153, %v756
  %v758 = vpop.f32.mrb[0].mxu0
  %759 = vmatprep.mubr.f32.mxu0 0.0
  %760 = vmatmul.mubr.f32.gmra.mrb[0].mxu0 %v253
  %v761 = vpop.f32.mrb[0].mxu0
  %v762 = vadd.f32 %v153, %v761
  %v763 = vpop.f32.mrb[0].mxu0
  %764 = vmatprep.mubr.f32.mxu0 0.0
  %765 = vmatmul.mubr.f32.gmra.mrb[0].mxu0 %v256
  %v766 = vpop.f32.mrb[0].mxu0
  %v767 = vadd.f32 %v153, %v766
  %v768 = vpop.f32.mrb[0].mxu0
  %769 = vmatprep.mubr.f32.mxu0 0.0
  %770 = vmatmul.mubr.f32.gmra.mrb[0].mxu0 %v259
  %v771 = vpop.f32.mrb[0].mxu0
  %v772 = vadd.f32 %v153, %v771
  %v773 = vpop.f32.mrb[0].mxu0
  %774 = vmatprep.mubr.f32.mxu0 0.0
  %775 = vmatmul.mubr.f32.gmra.mrb[0].mxu0 %v262
  %v776 = vpop.f32.mrb[0].mxu0
  %v777 = vadd.f32 %v153, %v776
  %v778 = vpop.f32.mrb[0].mxu0
  %779 = vmatprep.mubr.f32.mxu0 0.0
  %780 = vmatmul.mubr.f32.gmra.mrb[0].mxu0 %v265
  %v781 = vpop.f32.mrb[0].mxu0
  %v782 = vadd.f32 %v153, %v781
  %v783 = vpop.f32.mrb[0].mxu0
  %784 = vmatprep.mubr.f32.mxu0 0.0
  %785 = vmatmul.mubr.f32.gmra.mrb[0].mxu0 %v268
  %v786 = vpop.f32.mrb[0].mxu0
  %v787 = vadd.f32 %v153, %v786
  %v788 = vpop.f32.mrb[0].mxu0
  %789 = vmatprep.mubr.f32.mxu0 0.0
  %790 = vmatmul.mubr.f32.gmra.mrb[0].mxu0 %v271
  %v791 = vpop.f32.mrb[0].mxu0
  %v792 = vadd.f32 %v153, %v791
  %v793 = vpop.f32.mrb[0].mxu0
  %794 = vmatprep.mubr.f32.mxu0 0.0
  %795 = vmatmul.mubr.f32.gmra.mrb[0].mxu0 %v274
  %v796 = vpop.f32.mrb[0].mxu0
  %v797 = vadd.f32 %v153, %v796
  %v798 = vpop.f32.mrb[0].mxu0
  %799 = vmatprep.mubr.f32.mxu0 0.0
  %800 = vmatmul.mubr.f32.gmra.mrb[0].mxu0 %v277
  %v801 = vpop.f32.mrb[0].mxu0
  %v802 = vadd.f32 %v153, %v801
  %v803 = vpop.f32.mrb[0].mxu0
  %804 = vmatprep.mubr.f32.mxu0 0.0
  %805 = vmatmul.mubr.f32.gmra.mrb[0].mxu0 %v280
  %v806 = vpop.f32.mrb[0].mxu0
  %v807 = vadd.f32 %v153, %v806
  %v808 = vpop.f32.mrb[0].mxu0
  %809 = vmatprep.mubr.f32.mxu0 0.0
  %810 = vmatmul.mubr.f32.gmra.mrb[0].mxu0 %v283
  %v811 = vpop.f32.mrb[0].mxu0
  %v812 = vadd.f32 %v153, %v811
  %v813 = vpop.f32.mrb[0].mxu0
  %814 = vmatprep.mubr.f32.mxu0 0.0
  %815 = vmatmul.mubr.f32.gmra.mrb[0].mxu0 %v286
  %v816 = vpop.f32.mrb[0].mxu0
  %v817 = vadd.f32 %v153, %v816
  %v818 = vpop.f32.mrb[0].mxu0
  %819 = vmatprep.mubr.f32.mxu0 0.0
  %820 = vmatmul.mubr.f32.gmra.mrb[0].mxu0 %v289
  %v821 = vpop.f32.mrb[0].mxu0
  %v822 = vadd.f32 %v153, %v821
  %v823 = vpop.f32.mrb[0].mxu0
  %824 = vmatprep.mubr.f32.mxu0 0.0
  %825 = vmatmul.mubr.f32.gmra.mrb[0].mxu0 %v292
  %v826 = vpop.f32.mrb[0].mxu0
  %v827 = vadd.f32 %v153, %v826
  %v828 = vpop.f32.mrb[0].mxu0
  %829 = vmatprep.mubr.f32.mxu0 0.0
  %830 = vmatmul.mubr.f32.gmra.mrb[0].mxu0 %v295
  %v831 = vpop.f32.mrb[0].mxu0
  %v832 = vadd.f32 %v153, %v831
  %v833 = vpop.f32.mrb[0].mxu0
  %834 = vmatprep.mubr.f32.mxu0 0.0
  %835 = vmatmul.mubr.f32.gmra.mrb[0].mxu0 %v298
  %v836 = vpop.f32.mrb[0].mxu0
  %v837 = vadd.f32 %v153, %v836
  %v838 = vpop.f32.mrb[0].mxu0
  %839 = vmatprep.mubr.f32.mxu0 0.0
  %840 = vmatmul.mubr.f32.gmra.mrb[0].mxu0 %v301
  %v841 = vpop.f32.mrb[0].mxu0
  %v842 = vadd.f32 %v153, %v841
  %v843 = vpop.f32.mrb[0].mxu0
  %844 = vmatprep.mubr.f32.mxu0 0.0
  %845 = vmatmul.mubr.f32.gmra.mrb[0].mxu0 %v304
  %v846 = vpop.f32.mrb[0].mxu0
  %v847 = vadd.f32 %v153, %v846
  %v848 = vpop.f32.mrb[0].mxu0
  %849 = vmatprep.mubr.f32.mxu0 0.0
  %850 = vmatmul.mubr.f32.gmra.mrb[0].mxu0 %v307
  %v851 = vpop.f32.mrb[0].mxu0
  %v852 = vadd.f32 %v153, %v851
  %v853 = vpop.f32.mrb[0].mxu0
  %854 = vmatprep.mubr.f32.mxu0 0.0
  %855 = vmatmul.mubr.f32.gmra.mrb[0].mxu0 %v310
  %v856 = vpop.f32.mrb[0].mxu0
  %v857 = vadd.f32 %v153, %v856
  %v858 = vpop.f32.mrb[0].mxu0
  %859 = vmatprep.mubr.f32.mxu0 0.0
  %860 = vmatmul.mubr.f32.gmra.mrb[0].mxu0 %v313
  %v861 = vpop.f32.mrb[0].mxu0
  %v862 = vadd.f32 %v153, %v861
  %v863 = vpop.f32.mrb[0].mxu0
  %864 = vmatprep.mubr.f32.mxu0 0.0
  %865 = vmatmul.mubr.f32.gmra.mrb[0].mxu0 %v316
  %v866 = vpop.f32.mrb[0].mxu0
  %v867 = vadd.f32 %v153, %v866
  %v868 = vpop.f32.mrb[0].mxu0
  %869 = vmatprep.mubr.f32.mxu0 0.0
  %870 = vmatmul.mubr.f32.gmra.mrb[0].mxu0 %v319
  %v871 = vpop.f32.mrb[0].mxu0
  %v872 = vadd.f32 %v153, %v871
  %v873 = vpop.f32.mrb[0].mxu0
  %874 = vmatprep.mubr.f32.mxu0 0.0
  %875 = vmatmul.mubr.f32.gmra.mrb[0].mxu0 %v322
  %v876 = vpop.f32.mrb[0].mxu0
  %v877 = vadd.f32 %v153, %v876
  %v878 = vpop.f32.mrb[0].mxu0
  %879 = vmatprep.mubr.f32.mxu0 0.0
  %880 = vmatmul.mubr.f32.gmra.mrb[0].mxu0 %v325
  %v881 = vpop.f32.mrb[0].mxu0
  %v882 = vadd.f32 %v153, %v881
  %v883 = vpop.f32.mrb[0].mxu0
  %884 = vmatprep.mubr.f32.mxu0 0.0
  %885 = vmatmul.mubr.f32.gmra.mrb[0].mxu0 %v328
  %v886 = vpop.f32.mrb[0].mxu0
  %v887 = vadd.f32 %v153, %v886
  %v888 = vpop.f32.mrb[0].mxu0
  %889 = vmatprep.mubr.f32.mxu0 0.0
  %890 = vmatmul.mubr.f32.gmra.mrb[0].mxu0 %v331
  %v891 = vpop.f32.mrb[0].mxu0
  %v892 = vadd.f32 %v153, %v891
  %v893 = vpop.f32.mrb[0].mxu0
  %894 = vmatprep.mubr.f32.mxu0 0.0
  %895 = vmatmul.mubr.f32.gmra.mrb[0].mxu0 %v334
  %v896 = vpop.f32.mrb[0].mxu0
  %v897 = vadd.f32 %v153, %v896
  %v898 = vpop.f32.mrb[0].mxu0
  %899 = vmatprep.mubr.f32.mxu0 0.0
  %900 = vmatmul.mubr.f32.gmra.mrb[0].mxu0 %v337
  %v901 = vpop.f32.mrb[0].mxu0
  %v902 = vadd.f32 %v153, %v901
  %v903 = vpop.f32.mrb[0].mxu0
  %904 = vmatprep.mubr.f32.mxu0 0.0
  %905 = vmatmul.mubr.f32.gmra.mrb[0].mxu0 %v340
  %v906 = vpop.f32.mrb[0].mxu0
  %v907 = vadd.f32 %v153, %v906
  %v908 = vpop.f32.mrb[0].mxu0
  %909 = vmatprep.mubr.f32.mxu0 0.0
  %910 = vmatmul.mubr.f32.gmra.mrb[0].mxu0 %v343
  %v911 = vpop.f32.mrb[0].mxu0
  %v912 = vadd.f32 %v153, %v911
  %v913 = vpop.f32.mrb[0].mxu0
  %914 = vmatprep.mubr.f32.mxu0 0.0
  %915 = vmatmul.mubr.f32.gmra.mrb[0].mxu0 %v346
  %v916 = vpop.f32.mrb[0].mxu0
  %v917 = vadd.f32 %v153, %v916
  %v918 = vpop.f32.mrb[0].mxu0
  %919 = vmatprep.mubr.f32.mxu0 0.0
  %920 = vmatmul.mubr.f32.gmra.mrb[0].mxu0 %v349
  %v921 = vpop.f32.mrb[0].mxu0
  %v922 = vadd.f32 %v153, %v921
  %v923 = vpop.f32.mrb[0].mxu0
  %924 = vmatprep.mubr.f32.mxu0 0.0
  %925 = vmatmul.mubr.f32.gmra.mrb[0].mxu0 %v352
  %v926 = vpop.f32.mrb[0].mxu0
  %v927 = vadd.f32 %v153, %v926
  %v928 = vpop.f32.mrb[0].mxu0
  %929 = vmatprep.mubr.f32.mxu0 0.0
  %930 = vmatmul.mubr.f32.gmra.mrb[0].mxu0 %v355
  %v931 = vpop.f32.mrb[0].mxu0
  %v932 = vadd.f32 %v153, %v931
  %v933 = vpop.f32.mrb[0].mxu0
  %934 = vmatprep.mubr.f32.mxu0 0.0
  %935 = vmatmul.mubr.f32.gmra.mrb[0].mxu0 %v358
  %v936 = vpop.f32.mrb[0].mxu0
  %v937 = vadd.f32 %v153, %v936
  %v938 = vpop.f32.mrb[0].mxu0
  %939 = vmatprep.mubr.f32.mxu0 0.0
  %940 = vmatmul.mubr.f32.gmra.mrb[0].mxu0 %v361
  %v941 = vpop.f32.mrb[0].mxu0
  %v942 = vadd.f32 %v153, %v941
  %v943 = vpop.f32.mrb[0].mxu0
  %944 = vmatprep.mubr.f32.mxu0 0.0
  %945 = vmatmul.mubr.f32.gmra.mrb[0].mxu0 %v364
  %v946 = vpop.f32.mrb[0].mxu0
  %v947 = vadd.f32 %v153, %v946
  %v948 = vpop.f32.mrb[0].mxu0
  %949 = vmatprep.mubr.f32.mxu0 0.0
  %950 = vmatmul.mubr.f32.gmra.mrb[0].mxu0 %v367
  %v951 = vpop.f32.mrb[0].mxu0
  %v952 = vadd.f32 %v153, %v951
  %v953 = vpop.f32.mrb[0].mxu0
  %954 = vmatprep.mubr.f32.mxu0 0.0
  %955 = vmatmul.mubr.f32.gmra.mrb[0].mxu0 %v370
  %v956 = vpop.f32.mrb[0].mxu0
  %v957 = vadd.f32 %v153, %v956
  %v958 = vpop.f32.mrb[0].mxu0
  %959 = vmatprep.mubr.f32.mxu0 0.0
  %960 = vmatmul.mubr.f32.gmra.mrb[0].mxu0 %v373
  %v961 = vpop.f32.mrb[0].mxu0
  %v962 = vadd.f32 %v153, %v961
  %v963 = vpop.f32.mrb[0].mxu0
  %964 = vmatprep.mubr.f32.mxu0 0.0
  %965 = vmatmul.mubr.f32.gmra.mrb[0].mxu0 %v376
  %v966 = vpop.f32.mrb[0].mxu0
  %v967 = vadd.f32 %v153, %v966
  %v968 = vpop.f32.mrb[0].mxu0
  %969 = vmatprep.mubr.f32.mxu0 0.0
  %970 = vmatmul.mubr.f32.gmra.mrb[0].mxu0 %v379
  %v971 = vpop.f32.mrb[0].mxu0
  %v972 = vadd.f32 %v153, %v971
  %v973 = vpop.f32.mrb[0].mxu0
  %974 = vmatprep.mubr.f32.mxu0 0.0
  %975 = vmatmul.mubr.f32.gmra.mrb[0].mxu0 %v382
  %v976 = vpop.f32.mrb[0].mxu0
  %v977 = vadd.f32 %v153, %v976
  %v978 = vpop.f32.mrb[0].mxu0
  %979 = vmatprep.mubr.f32.mxu0 0.0
  %980 = vmatmul.mubr.f32.gmra.mrb[0].mxu0 %v385
  %v981 = vpop.f32.mrb[0].mxu0
  %v982 = vadd.f32 %v153, %v981
  %v983 = vpop.f32.mrb[0].mxu0
  %984 = vmatprep.mubr.f32.mxu0 0.0
  %985 = vmatmul.mubr.f32.gmra.mrb[0].mxu0 %v388
  %v986 = vpop.f32.mrb[0].mxu0
  %v987 = vadd.f32 %v153, %v986
  %v988 = vpop.f32.mrb[0].mxu0
  %989 = vmatprep.mubr.f32.mxu0 0.0
  %990 = vmatmul.mubr.f32.gmra.mrb[0].mxu0 %v391
  %v991 = vpop.f32.mrb[0].mxu0
  %v992 = vadd.f32 %v153, %v991
  %v993 = vpop.f32.mrb[0].mxu0
  %994 = vmatprep.mubr.f32.mxu0 0.0
  %995 = vmatmul.mubr.f32.gmra.mrb[0].mxu0 %v394
  %v996 = vpop.f32.mrb[0].mxu0
  %v997 = vadd.f32 %v153, %v996
  %v998 = vpop.f32.mrb[0].mxu0
  %999 = vmatprep.mubr.f32.mxu0 0.0
  %1000 = vmatmul.mubr.f32.gmra.mrb[0].mxu0 %v397
  %v1001 = vpop.f32.mrb[0].mxu0
  %v1002 = vadd.f32 %v153, %v1001
  %v1003 = vpop.f32.mrb[0].mxu0
  %1004 = vmatprep.mubr.f32.mxu0 0.0
  %1005 = vmatmul.mubr.f32.gmra.mrb[0].mxu0 %v400
  %v1006 = vpop.f32.mrb[0].mxu0
  %v1007 = vadd.f32 %v153, %v1006
  %v1008 = vpop.f32.mrb[0].mxu0
  %1009 = vmatprep.mubr.f32.mxu0 0.0
  %1010 = vmatmul.mubr.f32.gmra.mrb[0].mxu0 %v403
  %v1011 = vpop.f32.mrb[0].mxu0
  %v1012 = vadd.f32 %v153, %v1011
  %v1013 = vpop.f32.mrb[0].mxu0
  %1014 = vmatprep.mubr.f32.mxu0 0.0
  %1015 = vmatmul.mubr.f32.gmra.mrb[0].mxu0 %v406
  %v1016 = vpop.f32.mrb[0].mxu0
  %v1017 = vadd.f32 %v153, %v1016
  %v1018 = vpop.f32.mrb[0].mxu0
  %1019 = vmatprep.mubr.f32.mxu0 0.0
  %1020 = vmatmul.mubr.f32.gmra.mrb[0].mxu0 %v409
  %v1021 = vpop.f32.mrb[0].mxu0
  %v1022 = vadd.f32 %v153, %v1021
  %v1023 = vpop.f32.mrb[0].mxu0
  %1024 = vmatprep.mubr.f32.mxu0 0.0
  %1025 = vmatmul.mubr.f32.gmra.mrb[0].mxu0 %v412
  %v1026 = vpop.f32.mrb[0].mxu0
  %v1027 = vadd.f32 %v153, %v1026
  %v1028 = vpop.f32.mrb[0].mxu0
  %1029 = vmatprep.mubr.f32.mxu0 0.0
  %1030 = vmatmul.mubr.f32.gmra.mrb[0].mxu0 %v415
  %v1031 = vpop.f32.mrb[0].mxu0
  %v1032 = vadd.f32 %v153, %v1031
  %v1033 = vpop.f32.mrb[0].mxu0
  %1034 = vmatprep.mubr.f32.mxu0 0.0
  %1035 = vmatmul.mubr.f32.gmra.mrb[0].mxu0 %v418
  %v1036 = vpop.f32.mrb[0].mxu0
  %v1037 = vadd.f32 %v153, %v1036
  %v1038 = vpop.f32.mrb[0].mxu0
  %1039 = vmatprep.mubr.f32.mxu0 0.0
  %1040 = vmatmul.mubr.f32.gmra.mrb[0].mxu0 %v421
  %v1041 = vpop.f32.mrb[0].mxu0
  %v1042 = vadd.f32 %v153, %v1041
  %v1043 = vpop.f32.mrb[0].mxu0
  %1044 = vmatprep.mubr.f32.mxu0 0.0
  %1045 = vmatmul.mubr.f32.gmra.mrb[0].mxu0 %v424
  %v1046 = vpop.f32.mrb[0].mxu0
  %v1047 = vadd.f32 %v153, %v1046
  %v1048 = vpop.f32.mrb[0].mxu0
  %1049 = vmatprep.mubr.f32.mxu0 0.0
  %1050 = vmatmul.mubr.f32.gmra.mrb[0].mxu0 %v427
  %v1051 = vpop.f32.mrb[0].mxu0
  %v1052 = vadd.f32 %v153, %v1051
  %v1053 = vpop.f32.mrb[0].mxu0
  %1054 = vmatprep.mubr.f32.mxu0 0.0
  %1055 = vmatmul.mubr.f32.gmra.mrb[0].mxu0 %v430
  %v1056 = vpop.f32.mrb[0].mxu0
  %v1057 = vadd.f32 %v153, %v1056
  %v1058 = vpop.f32.mrb[0].mxu0
  %1059 = vmatprep.mubr.f32.mxu0 0.0
  %1060 = vmatmul.mubr.f32.gmra.mrb[0].mxu0 %v433
  %v1061 = vpop.f32.mrb[0].mxu0
  %v1062 = vadd.f32 %v153, %v1061
  %v1063 = vpop.f32.mrb[0].mxu0
  %1064 = vmatprep.mubr.f32.mxu0 0.0
  %1065 = vmatmul.mubr.f32.gmra.mrb[0].mxu0 %v436
  %v1066 = vpop.f32.mrb[0].mxu0
  %v1067 = vadd.f32 %v153, %v1066
  %v1068 = vpop.f32.mrb[0].mxu0
  %1069 = vmatprep.mubr.f32.mxu0 0.0
  %1070 = vmatmul.mubr.f32.gmra.mrb[0].mxu0 %v439
  %v1071 = vpop.f32.mrb[0].mxu0
  %v1072 = vadd.f32 %v153, %v1071
  %v1073 = vpop.f32.mrb[0].mxu0
  %1074 = vmatprep.mubr.f32.mxu0 0.0
  %1075 = vmatmul.mubr.f32.gmra.mrb[0].mxu0 %v442
  %v1076 = vpop.f32.mrb[0].mxu0
  %v1077 = vadd.f32 %v153, %v1076
  %v1078 = vpop.f32.mrb[0].mxu0
  %1079 = vmatprep.mubr.f32.mxu0 0.0
  %1080 = vmatmul.mubr.f32.gmra.mrb[0].mxu0 %v445
  %v1081 = vpop.f32.mrb[0].mxu0
  %v1082 = vadd.f32 %v153, %v1081
  %v1083 = vpop.f32.mrb[0].mxu0
  %1084 = vmatprep.mubr.f32.mxu0 0.0
  %1085 = vmatmul.mubr.f32.gmra.mrb[0].mxu0 %v448
  %v1086 = vpop.f32.mrb[0].mxu0
  %v1087 = vadd.f32 %v153, %v1086
  %v1088 = vpop.f32.mrb[0].mxu0
  %1089 = vmatprep.mubr.f32.mxu0 0.0
  %1090 = vmatmul.mubr.f32.gmra.mrb[0].mxu0 %v451
  %v1091 = vpop.f32.mrb[0].mxu0
  %v1092 = vadd.f32 %v153, %v1091
  %v1093 = vpop.f32.mrb[0].mxu0
  %1094 = vmatprep.mubr.f32.mxu0 0.0
  %1095 = vmatmul.mubr.f32.gmra.mrb[0].mxu0 %v454
  %v1096 = vpop.f32.mrb[0].mxu0
  %v1097 = vadd.f32 %v153, %v1096
  %v1098 = vpop.f32.mrb[0].mxu0
  %1099 = vmatprep.mubr.f32.mxu0 0.0
  %1100 = vmatmul.mubr.f32.gmra.mrb[0].mxu0 %v457
  %v1101 = vpop.f32.mrb[0].mxu0
  %v1102 = vadd.f32 %v153, %v1101
  %v1103 = vpop.f32.mrb[0].mxu0
  %1104 = vmatprep.mubr.f32.mxu0 0.0
  %1105 = vmatmul.mubr.f32.gmra.mrb[0].mxu0 %v460
  %v1106 = vpop.f32.mrb[0].mxu0
  %v1107 = vadd.f32 %v153, %v1106
  %v1108 = vpop.f32.mrb[0].mxu0
  %1109 = vmatprep.mubr.f32.mxu0 0.0
  %1110 = vmatmul.mubr.f32.gmra.mrb[0].mxu0 %v463
  %v1111 = vpop.f32.mrb[0].mxu0
  %v1112 = vadd.f32 %v153, %v1111
  %v1113 = vpop.f32.mrb[0].mxu0
  %1114 = vmatprep.mubr.f32.mxu0 0.0
  %1115 = vmatmul.mubr.f32.gmra.mrb[0].mxu0 %v466
  %v1116 = vpop.f32.mrb[0].mxu0
  %v1117 = vadd.f32 %v153, %v1116
  %v1118 = vpop.f32.mrb[0].mxu0
  %1119 = vmatprep.mubr.f32.mxu0 0.0
  %1120 = vmatmul.mubr.f32.gmra.mrb[0].mxu0 %v469
  %v1121 = vpop.f32.mrb[0].mxu0
  %v1122 = vadd.f32 %v153, %v1121
  %v1123 = vpop.f32.mrb[0].mxu0
  %1124 = vmatprep.mubr.f32.mxu0 0.0
  %1125 = vmatmul.mubr.f32.gmra.mrb[0].mxu0 %v472
  %v1126 = vpop.f32.mrb[0].mxu0
  %v1127 = vadd.f32 %v153, %v1126
  %v1128 = vpop.f32.mrb[0].mxu0
  %1129 = vmatprep.mubr.f32.mxu0 0.0
  %1130 = vmatmul.mubr.f32.gmra.mrb[0].mxu0 %v475
  %v1131 = vpop.f32.mrb[0].mxu0
  %v1132 = vadd.f32 %v153, %v1131
  %v1133 = vpop.f32.mrb[0].mxu0
  %1134 = vmatprep.mubr.f32.mxu0 0.0
  %1135 = vmatmul.mubr.f32.gmra.mrb[0].mxu0 %v478
  %v1136 = vpop.f32.mrb[0].mxu0
  %v1137 = vadd.f32 %v153, %v1136
  %v1138 = vpop.f32.mrb[0].mxu0
  %1139 = vmatprep.mubr.f32.mxu0 0.0
  %1140 = vmatmul.mubr.f32.gmra.mrb[0].mxu0 %v481
  %v1141 = vpop.f32.mrb[0].mxu0
  %v1142 = vadd.f32 %v153, %v1141
  %v1143 = vpop.f32.mrb[0].mxu0
  %1144 = vmatprep.mubr.f32.mxu0 0.0
  %1145 = vmatmul.mubr.f32.gmra.mrb[0].mxu0 %v484
  %v1146 = vpop.f32.mrb[0].mxu0
  %v1147 = vadd.f32 %v153, %v1146
  %v1148 = vpop.f32.mrb[0].mxu0
  %1149 = vmatprep.mubr.f32.mxu0 0.0
  %1150 = vmatmul.mubr.f32.gmra.mrb[0].mxu0 %v487
  %v1151 = vpop.f32.mrb[0].mxu0
  %v1152 = vadd.f32 %v153, %v1151
  %v1153 = vpop.f32.mrb[0].mxu0
  %1154 = vmatprep.mubr.f32.mxu0 0.0
  %1155 = vmatmul.mubr.f32.gmra.mrb[0].mxu0 %v490
  %v1156 = vpop.f32.mrb[0].mxu0
  %v1157 = vadd.f32 %v153, %v1156
  %v1158 = vpop.f32.mrb[0].mxu0
  %1159 = vmatprep.mubr.f32.mxu0 0.0
  %1160 = vmatmul.mubr.f32.gmra.mrb[0].mxu0 %v493
  %v1161 = vpop.f32.mrb[0].mxu0
  %v1162 = vadd.f32 %v153, %v1161
  %v1163 = vpop.f32.mrb[0].mxu0
  %1164 = vmatprep.mubr.f32.mxu0 0.0
  %1165 = vmatmul.mubr.f32.gmra.mrb[0].mxu0 %v496
  %v1166 = vpop.f32.mrb[0].mxu0
  %v1167 = vadd.f32 %v153, %v1166
  %v1168 = vpop.f32.mrb[0].mxu0
  %1169 = vmatprep.mubr.f32.mxu0 0.0
  %1170 = vmatmul.mubr.f32.gmra.mrb[0].mxu0 %v499
  %v1171 = vpop.f32.mrb[0].mxu0
  %v1172 = vadd.f32 %v153, %v1171
  %v1173 = vpop.f32.mrb[0].mxu0
  %1174 = vmatprep.mubr.f32.mxu0 0.0
  %1175 = vmatmul.mubr.f32.gmra.mrb[0].mxu0 %v502
  %v1176 = vpop.f32.mrb[0].mxu0
  %v1177 = vadd.f32 %v153, %v1176
  %v1178 = vpop.f32.mrb[0].mxu0
  %1179 = vmatprep.mubr.f32.mxu0 0.0
  %1180 = vmatmul.mubr.f32.gmra.mrb[0].mxu0 %v505
  %v1181 = vpop.f32.mrb[0].mxu0
  %v1182 = vadd.f32 %v153, %v1181
  %v1183 = vpop.f32.mrb[0].mxu0
  %1184 = vmatprep.mubr.f32.mxu0 0.0
  %1185 = vmatmul.mubr.f32.gmra.mrb[0].mxu0 %v508
  %v1186 = vpop.f32.mrb[0].mxu0
  %v1187 = vadd.f32 %v153, %v1186
  %v1188 = vpop.f32.mrb[0].mxu0
  %1189 = vmatprep.mubr.f32.mxu0 0.0
  %1190 = vmatmul.mubr.f32.gmra.mrb[0].mxu0 %v511
  %v1191 = vpop.f32.mrb[0].mxu0
  %v1192 = vadd.f32 %v153, %v1191
  %v1193 = vpop.f32.mrb[0].mxu0
  %1194 = vmatprep.mubr.f32.mxu0 0.0
  %1195 = vmatmul.mubr.f32.gmra.mrb[0].mxu0 %v514
  %v1196 = vpop.f32.mrb[0].mxu0
  %v1197 = vadd.f32 %v153, %v1196
  %v1198 = vpop.f32.mrb[0].mxu0
  %1199 = vmatprep.mubr.f32.mxu0 0.0
  %1200 = vmatmul.mubr.f32.gmra.mrb[0].mxu0 %v517
  %v1201 = vpop.f32.mrb[0].mxu0
  %v1202 = vadd.f32 %v153, %v1201
  %v1203 = vpop.f32.mrb[0].mxu0
  %1204 = vmatprep.mubr.f32.mxu0 0.0
  %1205 = vmatmul.mubr.f32.gmra.mrb[0].mxu0 %v520
  %v1206 = vpop.f32.mrb[0].mxu0
  %v1207 = vadd.f32 %v153, %v1206
  %v1208 = vpop.f32.mrb[0].mxu0
  %1209 = vmatprep.mubr.f32.mxu0 0.0
  %1210 = vmatmul.mubr.f32.gmra.mrb[0].mxu0 %v523
  %v1211 = vpop.f32.mrb[0].mxu0
  %v1212 = vadd.f32 %v153, %v1211
  %v1213 = vpop.f32.mrb[0].mxu0
  %1214 = vmatprep.mubr.f32.mxu0 0.0
  %1215 = vmatmul.mubr.f32.gmra.mrb[0].mxu0 %v526
  %v1216 = vpop.f32.mrb[0].mxu0
  %v1217 = vadd.f32 %v153, %v1216
  %v1218 = vpop.f32.mrb[0].mxu0
  %1219 = vmatprep.mubr.f32.mxu0 0.0
  %1220 = vmatmul.mubr.f32.gmra.mrb[0].mxu0 %v529
  %v1221 = vpop.f32.mrb[0].mxu0
  %v1222 = vadd.f32 %v153, %v1221
  %v1223 = vpop.f32.mrb[0].mxu0
  %1224 = vdwg.mxu0
  %v1225 = vmax.f32 %v602, 0.0
  %v1226 = vmax.f32 %v607, 0.0
  %v1227 = vmax.f32 %v612, 0.0
  %v1228 = vmax.f32 %v617, 0.0
  %v1229 = vmax.f32 %v622, 0.0
  %v1230 = vmax.f32 %v627, 0.0
  %v1231 = vmax.f32 %v632, 0.0
  %v1232 = vmax.f32 %v637, 0.0
  %v1233 = vmax.f32 %v642, 0.0
  %v1234 = vmax.f32 %v647, 0.0
  %v1235 = vmax.f32 %v652, 0.0
  %v1236 = vmax.f32 %v657, 0.0
  %v1237 = vmax.f32 %v662, 0.0
  %v1238 = vmax.f32 %v667, 0.0
  %v1239 = vmax.f32 %v672, 0.0
  %v1240 = vmax.f32 %v677, 0.0
  %v1241 = vmax.f32 %v682, 0.0
  %v1242 = vmax.f32 %v687, 0.0
  %v1243 = vmax.f32 %v692, 0.0
  %v1244 = vmax.f32 %v697, 0.0
  %v1245 = vmax.f32 %v702, 0.0
  %v1246 = vmax.f32 %v707, 0.0
  %v1247 = vmax.f32 %v712, 0.0
  %v1248 = vmax.f32 %v717, 0.0
  %v1249 = vmax.f32 %v722, 0.0
  %v1250 = vmax.f32 %v727, 0.0
  %v1251 = vmax.f32 %v732, 0.0
  %v1252 = vmax.f32 %v737, 0.0
  %v1253 = vmax.f32 %v742, 0.0
  %v1254 = vmax.f32 %v747, 0.0
  %v1255 = vmax.f32 %v752, 0.0
  %v1256 = vmax.f32 %v757, 0.0
  %v1257 = vmax.f32 %v762, 0.0
  %v1258 = vmax.f32 %v767, 0.0
  %v1259 = vmax.f32 %v772, 0.0
  %v1260 = vmax.f32 %v777, 0.0
  %v1261 = vmax.f32 %v782, 0.0
  %v1262 = vmax.f32 %v787, 0.0
  %v1263 = vmax.f32 %v792, 0.0
  %v1264 = vmax.f32 %v797, 0.0
  %v1265 = vmax.f32 %v802, 0.0
  %v1266 = vmax.f32 %v807, 0.0
  %v1267 = vmax.f32 %v812, 0.0
  %v1268 = vmax.f32 %v817, 0.0
  %v1269 = vmax.f32 %v822, 0.0
  %v1270 = vmax.f32 %v827, 0.0
  %v1271 = vmax.f32 %v832, 0.0
  %v1272 = vmax.f32 %v837, 0.0
  %v1273 = vmax.f32 %v842, 0.0
  %v1274 = vmax.f32 %v847, 0.0
  %v1275 = vmax.f32 %v852, 0.0
  %v1276 = vmax.f32 %v857, 0.0
  %v1277 = vmax.f32 %v862, 0.0
  %v1278 = vmax.f32 %v867, 0.0
  %v1279 = vmax.f32 %v872, 0.0
  %v1280 = vmax.f32 %v877, 0.0
  %v1281 = vmax.f32 %v882, 0.0
  %v1282 = vmax.f32 %v887, 0.0
  %v1283 = vmax.f32 %v892, 0.0
  %v1284 = vmax.f32 %v897, 0.0
  %v1285 = vmax.f32 %v902, 0.0
  %v1286 = vmax.f32 %v907, 0.0
  %v1287 = vmax.f32 %v912, 0.0
  %v1288 = vmax.f32 %v917, 0.0
  %v1289 = vmax.f32 %v922, 0.0
  %v1290 = vmax.f32 %v927, 0.0
  %v1291 = vmax.f32 %v932, 0.0
  %v1292 = vmax.f32 %v937, 0.0
  %v1293 = vmax.f32 %v942, 0.0
  %v1294 = vmax.f32 %v947, 0.0
  %v1295 = vmax.f32 %v952, 0.0
  %v1296 = vmax.f32 %v957, 0.0
  %v1297 = vmax.f32 %v962, 0.0
  %v1298 = vmax.f32 %v967, 0.0
  %v1299 = vmax.f32 %v972, 0.0
  %v1300 = vmax.f32 %v977, 0.0
  %v1301 = vmax.f32 %v982, 0.0
  %v1302 = vmax.f32 %v987, 0.0
  %v1303 = vmax.f32 %v992, 0.0
  %v1304 = vmax.f32 %v997, 0.0
  %v1305 = vmax.f32 %v1002, 0.0
  %v1306 = vmax.f32 %v1007, 0.0
  %v1307 = vmax.f32 %v1012, 0.0
  %v1308 = vmax.f32 %v1017, 0.0
  %v1309 = vmax.f32 %v1022, 0.0
  %v1310 = vmax.f32 %v1027, 0.0
  %v1311 = vmax.f32 %v1032, 0.0
  %v1312 = vmax.f32 %v1037, 0.0
  %v1313 = vmax.f32 %v1042, 0.0
  %v1314 = vmax.f32 %v1047, 0.0
  %v1315 = vmax.f32 %v1052, 0.0
  %v1316 = vmax.f32 %v1057, 0.0
  %v1317 = vmax.f32 %v1062, 0.0
  %v1318 = vmax.f32 %v1067, 0.0
  %v1319 = vmax.f32 %v1072, 0.0
  %v1320 = vmax.f32 %v1077, 0.0
  %v1321 = vmax.f32 %v1082, 0.0
  %v1322 = vmax.f32 %v1087, 0.0
  %v1323 = vmax.f32 %v1092, 0.0
  %v1324 = vmax.f32 %v1097, 0.0
  %v1325 = vmax.f32 %v1102, 0.0
  %v1326 = vmax.f32 %v1107, 0.0
  %v1327 = vmax.f32 %v1112, 0.0
  %v1328 = vmax.f32 %v1117, 0.0
  %v1329 = vmax.f32 %v1122, 0.0
  %v1330 = vmax.f32 %v1127, 0.0
  %v1331 = vmax.f32 %v1132, 0.0
  %v1332 = vmax.f32 %v1137, 0.0
  %v1333 = vmax.f32 %v1142, 0.0
  %v1334 = vmax.f32 %v1147, 0.0
  %v1335 = vmax.f32 %v1152, 0.0
  %v1336 = vmax.f32 %v1157, 0.0
  %v1337 = vmax.f32 %v1162, 0.0
  %v1338 = vmax.f32 %v1167, 0.0
  %v1339 = vmax.f32 %v1172, 0.0
  %v1340 = vmax.f32 %v1177, 0.0
  %v1341 = vmax.f32 %v1182, 0.0
  %v1342 = vmax.f32 %v1187, 0.0
  %v1343 = vmax.f32 %v1192, 0.0
  %v1344 = vmax.f32 %v1197, 0.0
  %v1345 = vmax.f32 %v1202, 0.0
  %v1346 = vmax.f32 %v1207, 0.0
  %v1347 = vmax.f32 %v1212, 0.0
  %v1348 = vmax.f32 %v1217, 0.0
  %v1349 = vmax.f32 %v1222, 0.0
  %v1350 = vld [vmem:[%s3] sm:$0xff]
  %v1351 = vld [vmem:[%s3 + $0x8] sm:$0xff]
  %v1352 = vld [vmem:[%s3 + $0x10] sm:$0xff]
  %v1353 = vld [vmem:[%s3 + $0x18] sm:$0xff]
  %v1354 = vld [vmem:[%s3 + $0x20] sm:$0xff]
  %v1355 = vld [vmem:[%s3 + $0x28] sm:$0xff]
  %v1356 = vld [vmem:[%s3 + $0x30] sm:$0xff]
  %v1357 = vld [vmem:[%s3 + $0x38] sm:$0xff]
  %v1358 = vld [vmem:[%s3 + $0x40] sm:$0xff]
  %v1359 = vld [vmem:[%s3 + $0x48] sm:$0xff]
  %v1360 = vld [vmem:[%s3 + $0x50] sm:$0xff]
  %v1361 = vld [vmem:[%s3 + $0x58] sm:$0xff]
  %v1362 = vld [vmem:[%s3 + $0x60] sm:$0xff]
  %v1363 = vld [vmem:[%s3 + $0x68] sm:$0xff]
  %v1364 = vld [vmem:[%s3 + $0x70] sm:$0xff]
  %v1365 = vld [vmem:[%s3 + $0x78] sm:$0xff]
  %v1366 = vld [vmem:[#allocation2] sm:$0x1]
  %v1368 = vlaneseq
  %v1369 = vshrl.u32 %v1368, 7
  %v1370 = vsub.s32 0, %v1369
  %v1371 = vrot.slane %v1366, %v1370
  %1373 = vmatprep.subr.mxu0 0.0
  %1374 = vmatpush1.msra.mxu0 %v1350
  %1375 = vmatprep.subr.mxu0 0.0
  %1376 = vmatpush1.msra.mxu0 %v1351
  %1377 = vmatprep.subr.mxu0 0.0
  %1378 = vmatpush1.msra.mxu0 %v1352
  %1379 = vmatprep.subr.mxu0 0.0
  %1380 = vmatpush1.msra.mxu0 %v1353
  %1381 = vmatprep.subr.mxu0 0.0
  %1382 = vmatpush1.msra.mxu0 %v1354
  %1383 = vmatprep.subr.mxu0 0.0
  %1384 = vmatpush1.msra.mxu0 %v1355
  %1385 = vmatprep.subr.mxu0 0.0
  %1386 = vmatpush1.msra.mxu0 %v1356
  %1387 = vmatprep.subr.mxu0 0.0
  %1388 = vmatpush1.msra.mxu0 %v1357
  %1389 = vmatprep.subr.mxu0 0.0
  %1390 = vmatpush1.msra.mxu0 %v1358
  %1391 = vmatprep.subr.mxu0 0.0
  %1392 = vmatpush1.msra.mxu0 %v1359
  %1393 = vmatprep.subr.mxu0 0.0
  %1394 = vmatpush1.msra.mxu0 %v1360
  %1395 = vmatprep.subr.mxu0 0.0
  %1396 = vmatpush1.msra.mxu0 %v1361
  %1397 = vmatprep.subr.mxu0 0.0
  %1398 = vmatpush1.msra.mxu0 %v1362
  %1399 = vmatprep.subr.mxu0 0.0
  %1400 = vmatpush1.msra.mxu0 %v1363
  %1401 = vmatprep.subr.mxu0 0.0
  %1402 = vmatpush1.msra.mxu0 %v1364
  %1403 = vmatprep.subr.mxu0 0.0
  %1404 = vmatpush1.msra.mxu0 %v1365
  %1405 = vmatprep.subr.mxu0 0.0
  %1406 = vmatpush1.msra.mxu0 0.0
  %1407 = vmatprep.subr.mxu0 0.0
  %1408 = vmatpush1.msra.mxu0 0.0
  %1409 = vmatprep.subr.mxu0 0.0
  %1410 = vmatpush1.msra.mxu0 0.0
  %1411 = vmatprep.subr.mxu0 0.0
  %1412 = vmatpush1.msra.mxu0 0.0
  %1413 = vmatprep.subr.mxu0 0.0
  %1414 = vmatpush1.msra.mxu0 0.0
  %1415 = vmatprep.subr.mxu0 0.0
  %1416 = vmatpush1.msra.mxu0 0.0
  %1417 = vmatprep.subr.mxu0 0.0
  %1418 = vmatpush1.msra.mxu0 0.0
  %1419 = vmatprep.subr.mxu0 0.0
  %1420 = vmatpush1.msra.mxu0 0.0
  %1421 = vmatprep.subr.mxu0 0.0
  %1422 = vmatpush1.msra.mxu0 0.0
  %1423 = vmatprep.subr.mxu0 0.0
  %1424 = vmatpush1.msra.mxu0 0.0
  %1425 = vmatprep.subr.mxu0 0.0
  %1426 = vmatpush1.msra.mxu0 0.0
  %1427 = vmatprep.subr.mxu0 0.0
  %1428 = vmatpush1.msra.mxu0 0.0
  %1429 = vmatprep.subr.mxu0 0.0
  %1430 = vmatpush1.msra.mxu0 0.0
  %1431 = vmatprep.subr.mxu0 0.0
  %1432 = vmatpush1.msra.mxu0 0.0
  %1433 = vmatprep.subr.mxu0 0.0
  %1434 = vmatpush1.msra.mxu0 0.0
  %1435 = vmatprep.subr.mxu0 0.0
  %1436 = vmatpush1.msra.mxu0 0.0
  %1437 = vmatprep.mubr.f32.mxu0 0.0
  %1438 = vmatmul.mubr.f32.gmra.mrb[0].mxu0 %v1225
  %v1439 = vpop.f32.mrb[0].mxu0
  %v1440 = vadd.f32 %v1371, %v1439
  %v1441 = vpop.f32.mrb[0].mxu0
  %1442 = vmatprep.mubr.f32.mxu0 0.0
  %1443 = vmatmul.mubr.f32.gmra.mrb[0].mxu0 %v1226
  %v1444 = vpop.f32.mrb[0].mxu0
  %v1445 = vadd.f32 %v1371, %v1444
  %v1446 = vpop.f32.mrb[0].mxu0
  %1447 = vmatprep.mubr.f32.mxu0 0.0
  %1448 = vmatmul.mubr.f32.gmra.mrb[0].mxu0 %v1227
  %v1449 = vpop.f32.mrb[0].mxu0
  %v1450 = vadd.f32 %v1371, %v1449
  %v1451 = vpop.f32.mrb[0].mxu0
  %1452 = vmatprep.mubr.f32.mxu0 0.0
  %1453 = vmatmul.mubr.f32.gmra.mrb[0].mxu0 %v1228
  %v1454 = vpop.f32.mrb[0].mxu0
  %v1455 = vadd.f32 %v1371, %v1454
  %v1456 = vpop.f32.mrb[0].mxu0
  %1457 = vmatprep.mubr.f32.mxu0 0.0
  %1458 = vmatmul.mubr.f32.gmra.mrb[0].mxu0 %v1229
  %v1459 = vpop.f32.mrb[0].mxu0
  %v1460 = vadd.f32 %v1371, %v1459
  %v1461 = vpop.f32.mrb[0].mxu0
  %1462 = vmatprep.mubr.f32.mxu0 0.0
  %1463 = vmatmul.mubr.f32.gmra.mrb[0].mxu0 %v1230
  %v1464 = vpop.f32.mrb[0].mxu0
  %v1465 = vadd.f32 %v1371, %v1464
  %v1466 = vpop.f32.mrb[0].mxu0
  %1467 = vmatprep.mubr.f32.mxu0 0.0
  %1468 = vmatmul.mubr.f32.gmra.mrb[0].mxu0 %v1231
  %v1469 = vpop.f32.mrb[0].mxu0
  %v1470 = vadd.f32 %v1371, %v1469
  %v1471 = vpop.f32.mrb[0].mxu0
  %1472 = vmatprep.mubr.f32.mxu0 0.0
  %1473 = vmatmul.mubr.f32.gmra.mrb[0].mxu0 %v1232
  %v1474 = vpop.f32.mrb[0].mxu0
  %v1475 = vadd.f32 %v1371, %v1474
  %v1476 = vpop.f32.mrb[0].mxu0
  %1477 = vmatprep.mubr.f32.mxu0 0.0
  %1478 = vmatmul.mubr.f32.gmra.mrb[0].mxu0 %v1233
  %v1479 = vpop.f32.mrb[0].mxu0
  %v1480 = vadd.f32 %v1371, %v1479
  %v1481 = vpop.f32.mrb[0].mxu0
  %1482 = vmatprep.mubr.f32.mxu0 0.0
  %1483 = vmatmul.mubr.f32.gmra.mrb[0].mxu0 %v1234
  %v1484 = vpop.f32.mrb[0].mxu0
  %v1485 = vadd.f32 %v1371, %v1484
  %v1486 = vpop.f32.mrb[0].mxu0
  %1487 = vmatprep.mubr.f32.mxu0 0.0
  %1488 = vmatmul.mubr.f32.gmra.mrb[0].mxu0 %v1235
  %v1489 = vpop.f32.mrb[0].mxu0
  %v1490 = vadd.f32 %v1371, %v1489
  %v1491 = vpop.f32.mrb[0].mxu0
  %1492 = vmatprep.mubr.f32.mxu0 0.0
  %1493 = vmatmul.mubr.f32.gmra.mrb[0].mxu0 %v1236
  %v1494 = vpop.f32.mrb[0].mxu0
  %v1495 = vadd.f32 %v1371, %v1494
  %v1496 = vpop.f32.mrb[0].mxu0
  %1497 = vmatprep.mubr.f32.mxu0 0.0
  %1498 = vmatmul.mubr.f32.gmra.mrb[0].mxu0 %v1237
  %v1499 = vpop.f32.mrb[0].mxu0
  %v1500 = vadd.f32 %v1371, %v1499
  %v1501 = vpop.f32.mrb[0].mxu0
  %1502 = vmatprep.mubr.f32.mxu0 0.0
  %1503 = vmatmul.mubr.f32.gmra.mrb[0].mxu0 %v1238
  %v1504 = vpop.f32.mrb[0].mxu0
  %v1505 = vadd.f32 %v1371, %v1504
  %v1506 = vpop.f32.mrb[0].mxu0
  %1507 = vmatprep.mubr.f32.mxu0 0.0
  %1508 = vmatmul.mubr.f32.gmra.mrb[0].mxu0 %v1239
  %v1509 = vpop.f32.mrb[0].mxu0
  %v1510 = vadd.f32 %v1371, %v1509
  %v1511 = vpop.f32.mrb[0].mxu0
  %1512 = vmatprep.mubr.f32.mxu0 0.0
  %1513 = vmatmul.mubr.f32.gmra.mrb[0].mxu0 %v1240
  %v1514 = vpop.f32.mrb[0].mxu0
  %v1515 = vadd.f32 %v1371, %v1514
  %v1516 = vpop.f32.mrb[0].mxu0
  %1517 = vmatprep.mubr.f32.mxu0 0.0
  %1518 = vmatmul.mubr.f32.gmra.mrb[0].mxu0 %v1241
  %v1519 = vpop.f32.mrb[0].mxu0
  %v1520 = vadd.f32 %v1371, %v1519
  %v1521 = vpop.f32.mrb[0].mxu0
  %1522 = vmatprep.mubr.f32.mxu0 0.0
  %1523 = vmatmul.mubr.f32.gmra.mrb[0].mxu0 %v1242
  %v1524 = vpop.f32.mrb[0].mxu0
  %v1525 = vadd.f32 %v1371, %v1524
  %v1526 = vpop.f32.mrb[0].mxu0
  %1527 = vmatprep.mubr.f32.mxu0 0.0
  %1528 = vmatmul.mubr.f32.gmra.mrb[0].mxu0 %v1243
  %v1529 = vpop.f32.mrb[0].mxu0
  %v1530 = vadd.f32 %v1371, %v1529
  %v1531 = vpop.f32.mrb[0].mxu0
  %1532 = vmatprep.mubr.f32.mxu0 0.0
  %1533 = vmatmul.mubr.f32.gmra.mrb[0].mxu0 %v1244
  %v1534 = vpop.f32.mrb[0].mxu0
  %v1535 = vadd.f32 %v1371, %v1534
  %v1536 = vpop.f32.mrb[0].mxu0
  %1537 = vmatprep.mubr.f32.mxu0 0.0
  %1538 = vmatmul.mubr.f32.gmra.mrb[0].mxu0 %v1245
  %v1539 = vpop.f32.mrb[0].mxu0
  %v1540 = vadd.f32 %v1371, %v1539
  %v1541 = vpop.f32.mrb[0].mxu0
  %1542 = vmatprep.mubr.f32.mxu0 0.0
  %1543 = vmatmul.mubr.f32.gmra.mrb[0].mxu0 %v1246
  %v1544 = vpop.f32.mrb[0].mxu0
  %v1545 = vadd.f32 %v1371, %v1544
  %v1546 = vpop.f32.mrb[0].mxu0
  %1547 = vmatprep.mubr.f32.mxu0 0.0
  %1548 = vmatmul.mubr.f32.gmra.mrb[0].mxu0 %v1247
  %v1549 = vpop.f32.mrb[0].mxu0
  %v1550 = vadd.f32 %v1371, %v1549
  %v1551 = vpop.f32.mrb[0].mxu0
  %1552 = vmatprep.mubr.f32.mxu0 0.0
  %1553 = vmatmul.mubr.f32.gmra.mrb[0].mxu0 %v1248
  %v1554 = vpop.f32.mrb[0].mxu0
  %v1555 = vadd.f32 %v1371, %v1554
  %v1556 = vpop.f32.mrb[0].mxu0
  %1557 = vmatprep.mubr.f32.mxu0 0.0
  %1558 = vmatmul.mubr.f32.gmra.mrb[0].mxu0 %v1249
  %v1559 = vpop.f32.mrb[0].mxu0
  %v1560 = vadd.f32 %v1371, %v1559
  %v1561 = vpop.f32.mrb[0].mxu0
  %1562 = vmatprep.mubr.f32.mxu0 0.0
  %1563 = vmatmul.mubr.f32.gmra.mrb[0].mxu0 %v1250
  %v1564 = vpop.f32.mrb[0].mxu0
  %v1565 = vadd.f32 %v1371, %v1564
  %v1566 = vpop.f32.mrb[0].mxu0
  %1567 = vmatprep.mubr.f32.mxu0 0.0
  %1568 = vmatmul.mubr.f32.gmra.mrb[0].mxu0 %v1251
  %v1569 = vpop.f32.mrb[0].mxu0
  %v1570 = vadd.f32 %v1371, %v1569
  %v1571 = vpop.f32.mrb[0].mxu0
  %1572 = vmatprep.mubr.f32.mxu0 0.0
  %1573 = vmatmul.mubr.f32.gmra.mrb[0].mxu0 %v1252
  %v1574 = vpop.f32.mrb[0].mxu0
  %v1575 = vadd.f32 %v1371, %v1574
  %v1576 = vpop.f32.mrb[0].mxu0
  %1577 = vmatprep.mubr.f32.mxu0 0.0
  %1578 = vmatmul.mubr.f32.gmra.mrb[0].mxu0 %v1253
  %v1579 = vpop.f32.mrb[0].mxu0
  %v1580 = vadd.f32 %v1371, %v1579
  %v1581 = vpop.f32.mrb[0].mxu0
  %1582 = vmatprep.mubr.f32.mxu0 0.0
  %1583 = vmatmul.mubr.f32.gmra.mrb[0].mxu0 %v1254
  %v1584 = vpop.f32.mrb[0].mxu0
  %v1585 = vadd.f32 %v1371, %v1584
  %v1586 = vpop.f32.mrb[0].mxu0
  %1587 = vmatprep.mubr.f32.mxu0 0.0
  %1588 = vmatmul.mubr.f32.gmra.mrb[0].mxu0 %v1255
  %v1589 = vpop.f32.mrb[0].mxu0
  %v1590 = vadd.f32 %v1371, %v1589
  %v1591 = vpop.f32.mrb[0].mxu0
  %1592 = vmatprep.mubr.f32.mxu0 0.0
  %1593 = vmatmul.mubr.f32.gmra.mrb[0].mxu0 %v1256
  %v1594 = vpop.f32.mrb[0].mxu0
  %v1595 = vadd.f32 %v1371, %v1594
  %v1596 = vpop.f32.mrb[0].mxu0
  %1597 = vmatprep.mubr.f32.mxu0 0.0
  %1598 = vmatmul.mubr.f32.gmra.mrb[0].mxu0 %v1257
  %v1599 = vpop.f32.mrb[0].mxu0
  %v1600 = vadd.f32 %v1371, %v1599
  %v1601 = vpop.f32.mrb[0].mxu0
  %1602 = vmatprep.mubr.f32.mxu0 0.0
  %1603 = vmatmul.mubr.f32.gmra.mrb[0].mxu0 %v1258
  %v1604 = vpop.f32.mrb[0].mxu0
  %v1605 = vadd.f32 %v1371, %v1604
  %v1606 = vpop.f32.mrb[0].mxu0
  %1607 = vmatprep.mubr.f32.mxu0 0.0
  %1608 = vmatmul.mubr.f32.gmra.mrb[0].mxu0 %v1259
  %v1609 = vpop.f32.mrb[0].mxu0
  %v1610 = vadd.f32 %v1371, %v1609
  %v1611 = vpop.f32.mrb[0].mxu0
  %1612 = vmatprep.mubr.f32.mxu0 0.0
  %1613 = vmatmul.mubr.f32.gmra.mrb[0].mxu0 %v1260
  %v1614 = vpop.f32.mrb[0].mxu0
  %v1615 = vadd.f32 %v1371, %v1614
  %v1616 = vpop.f32.mrb[0].mxu0
  %1617 = vmatprep.mubr.f32.mxu0 0.0
  %1618 = vmatmul.mubr.f32.gmra.mrb[0].mxu0 %v1261
  %v1619 = vpop.f32.mrb[0].mxu0
  %v1620 = vadd.f32 %v1371, %v1619
  %v1621 = vpop.f32.mrb[0].mxu0
  %1622 = vmatprep.mubr.f32.mxu0 0.0
  %1623 = vmatmul.mubr.f32.gmra.mrb[0].mxu0 %v1262
  %v1624 = vpop.f32.mrb[0].mxu0
  %v1625 = vadd.f32 %v1371, %v1624
  %v1626 = vpop.f32.mrb[0].mxu0
  %1627 = vmatprep.mubr.f32.mxu0 0.0
  %1628 = vmatmul.mubr.f32.gmra.mrb[0].mxu0 %v1263
  %v1629 = vpop.f32.mrb[0].mxu0
  %v1630 = vadd.f32 %v1371, %v1629
  %v1631 = vpop.f32.mrb[0].mxu0
  %1632 = vmatprep.mubr.f32.mxu0 0.0
  %1633 = vmatmul.mubr.f32.gmra.mrb[0].mxu0 %v1264
  %v1634 = vpop.f32.mrb[0].mxu0
  %v1635 = vadd.f32 %v1371, %v1634
  %v1636 = vpop.f32.mrb[0].mxu0
  %1637 = vmatprep.mubr.f32.mxu0 0.0
  %1638 = vmatmul.mubr.f32.gmra.mrb[0].mxu0 %v1265
  %v1639 = vpop.f32.mrb[0].mxu0
  %v1640 = vadd.f32 %v1371, %v1639
  %v1641 = vpop.f32.mrb[0].mxu0
  %1642 = vmatprep.mubr.f32.mxu0 0.0
  %1643 = vmatmul.mubr.f32.gmra.mrb[0].mxu0 %v1266
  %v1644 = vpop.f32.mrb[0].mxu0
  %v1645 = vadd.f32 %v1371, %v1644
  %v1646 = vpop.f32.mrb[0].mxu0
  %1647 = vmatprep.mubr.f32.mxu0 0.0
  %1648 = vmatmul.mubr.f32.gmra.mrb[0].mxu0 %v1267
  %v1649 = vpop.f32.mrb[0].mxu0
  %v1650 = vadd.f32 %v1371, %v1649
  %v1651 = vpop.f32.mrb[0].mxu0
  %1652 = vmatprep.mubr.f32.mxu0 0.0
  %1653 = vmatmul.mubr.f32.gmra.mrb[0].mxu0 %v1268
  %v1654 = vpop.f32.mrb[0].mxu0
  %v1655 = vadd.f32 %v1371, %v1654
  %v1656 = vpop.f32.mrb[0].mxu0
  %1657 = vmatprep.mubr.f32.mxu0 0.0
  %1658 = vmatmul.mubr.f32.gmra.mrb[0].mxu0 %v1269
  %v1659 = vpop.f32.mrb[0].mxu0
  %v1660 = vadd.f32 %v1371, %v1659
  %v1661 = vpop.f32.mrb[0].mxu0
  %1662 = vmatprep.mubr.f32.mxu0 0.0
  %1663 = vmatmul.mubr.f32.gmra.mrb[0].mxu0 %v1270
  %v1664 = vpop.f32.mrb[0].mxu0
  %v1665 = vadd.f32 %v1371, %v1664
  %v1666 = vpop.f32.mrb[0].mxu0
  %1667 = vmatprep.mubr.f32.mxu0 0.0
  %1668 = vmatmul.mubr.f32.gmra.mrb[0].mxu0 %v1271
  %v1669 = vpop.f32.mrb[0].mxu0
  %v1670 = vadd.f32 %v1371, %v1669
  %v1671 = vpop.f32.mrb[0].mxu0
  %1672 = vmatprep.mubr.f32.mxu0 0.0
  %1673 = vmatmul.mubr.f32.gmra.mrb[0].mxu0 %v1272
  %v1674 = vpop.f32.mrb[0].mxu0
  %v1675 = vadd.f32 %v1371, %v1674
  %v1676 = vpop.f32.mrb[0].mxu0
  %1677 = vmatprep.mubr.f32.mxu0 0.0
  %1678 = vmatmul.mubr.f32.gmra.mrb[0].mxu0 %v1273
  %v1679 = vpop.f32.mrb[0].mxu0
  %v1680 = vadd.f32 %v1371, %v1679
  %v1681 = vpop.f32.mrb[0].mxu0
  %1682 = vmatprep.mubr.f32.mxu0 0.0
  %1683 = vmatmul.mubr.f32.gmra.mrb[0].mxu0 %v1274
  %v1684 = vpop.f32.mrb[0].mxu0
  %v1685 = vadd.f32 %v1371, %v1684
  %v1686 = vpop.f32.mrb[0].mxu0
  %1687 = vmatprep.mubr.f32.mxu0 0.0
  %1688 = vmatmul.mubr.f32.gmra.mrb[0].mxu0 %v1275
  %v1689 = vpop.f32.mrb[0].mxu0
  %v1690 = vadd.f32 %v1371, %v1689
  %v1691 = vpop.f32.mrb[0].mxu0
  %1692 = vmatprep.mubr.f32.mxu0 0.0
  %1693 = vmatmul.mubr.f32.gmra.mrb[0].mxu0 %v1276
  %v1694 = vpop.f32.mrb[0].mxu0
  %v1695 = vadd.f32 %v1371, %v1694
  %v1696 = vpop.f32.mrb[0].mxu0
  %1697 = vmatprep.mubr.f32.mxu0 0.0
  %1698 = vmatmul.mubr.f32.gmra.mrb[0].mxu0 %v1277
  %v1699 = vpop.f32.mrb[0].mxu0
  %v1700 = vadd.f32 %v1371, %v1699
  %v1701 = vpop.f32.mrb[0].mxu0
  %1702 = vmatprep.mubr.f32.mxu0 0.0
  %1703 = vmatmul.mubr.f32.gmra.mrb[0].mxu0 %v1278
  %v1704 = vpop.f32.mrb[0].mxu0
  %v1705 = vadd.f32 %v1371, %v1704
  %v1706 = vpop.f32.mrb[0].mxu0
  %1707 = vmatprep.mubr.f32.mxu0 0.0
  %1708 = vmatmul.mubr.f32.gmra.mrb[0].mxu0 %v1279
  %v1709 = vpop.f32.mrb[0].mxu0
  %v1710 = vadd.f32 %v1371, %v1709
  %v1711 = vpop.f32.mrb[0].mxu0
  %1712 = vmatprep.mubr.f32.mxu0 0.0
  %1713 = vmatmul.mubr.f32.gmra.mrb[0].mxu0 %v1280
  %v1714 = vpop.f32.mrb[0].mxu0
  %v1715 = vadd.f32 %v1371, %v1714
  %v1716 = vpop.f32.mrb[0].mxu0
  %1717 = vmatprep.mubr.f32.mxu0 0.0
  %1718 = vmatmul.mubr.f32.gmra.mrb[0].mxu0 %v1281
  %v1719 = vpop.f32.mrb[0].mxu0
  %v1720 = vadd.f32 %v1371, %v1719
  %v1721 = vpop.f32.mrb[0].mxu0
  %1722 = vmatprep.mubr.f32.mxu0 0.0
  %1723 = vmatmul.mubr.f32.gmra.mrb[0].mxu0 %v1282
  %v1724 = vpop.f32.mrb[0].mxu0
  %v1725 = vadd.f32 %v1371, %v1724
  %v1726 = vpop.f32.mrb[0].mxu0
  %1727 = vmatprep.mubr.f32.mxu0 0.0
  %1728 = vmatmul.mubr.f32.gmra.mrb[0].mxu0 %v1283
  %v1729 = vpop.f32.mrb[0].mxu0
  %v1730 = vadd.f32 %v1371, %v1729
  %v1731 = vpop.f32.mrb[0].mxu0
  %1732 = vmatprep.mubr.f32.mxu0 0.0
  %1733 = vmatmul.mubr.f32.gmra.mrb[0].mxu0 %v1284
  %v1734 = vpop.f32.mrb[0].mxu0
  %v1735 = vadd.f32 %v1371, %v1734
  %v1736 = vpop.f32.mrb[0].mxu0
  %1737 = vmatprep.mubr.f32.mxu0 0.0
  %1738 = vmatmul.mubr.f32.gmra.mrb[0].mxu0 %v1285
  %v1739 = vpop.f32.mrb[0].mxu0
  %v1740 = vadd.f32 %v1371, %v1739
  %v1741 = vpop.f32.mrb[0].mxu0
  %1742 = vmatprep.mubr.f32.mxu0 0.0
  %1743 = vmatmul.mubr.f32.gmra.mrb[0].mxu0 %v1286
  %v1744 = vpop.f32.mrb[0].mxu0
  %v1745 = vadd.f32 %v1371, %v1744
  %v1746 = vpop.f32.mrb[0].mxu0
  %1747 = vmatprep.mubr.f32.mxu0 0.0
  %1748 = vmatmul.mubr.f32.gmra.mrb[0].mxu0 %v1287
  %v1749 = vpop.f32.mrb[0].mxu0
  %v1750 = vadd.f32 %v1371, %v1749
  %v1751 = vpop.f32.mrb[0].mxu0
  %1752 = vmatprep.mubr.f32.mxu0 0.0
  %1753 = vmatmul.mubr.f32.gmra.mrb[0].mxu0 %v1288
  %v1754 = vpop.f32.mrb[0].mxu0
  %v1755 = vadd.f32 %v1371, %v1754
  %v1756 = vpop.f32.mrb[0].mxu0
  %1757 = vmatprep.mubr.f32.mxu0 0.0
  %1758 = vmatmul.mubr.f32.gmra.mrb[0].mxu0 %v1289
  %v1759 = vpop.f32.mrb[0].mxu0
  %v1760 = vadd.f32 %v1371, %v1759
  %v1761 = vpop.f32.mrb[0].mxu0
  %1762 = vmatprep.mubr.f32.mxu0 0.0
  %1763 = vmatmul.mubr.f32.gmra.mrb[0].mxu0 %v1290
  %v1764 = vpop.f32.mrb[0].mxu0
  %v1765 = vadd.f32 %v1371, %v1764
  %v1766 = vpop.f32.mrb[0].mxu0
  %1767 = vmatprep.mubr.f32.mxu0 0.0
  %1768 = vmatmul.mubr.f32.gmra.mrb[0].mxu0 %v1291
  %v1769 = vpop.f32.mrb[0].mxu0
  %v1770 = vadd.f32 %v1371, %v1769
  %v1771 = vpop.f32.mrb[0].mxu0
  %1772 = vmatprep.mubr.f32.mxu0 0.0
  %1773 = vmatmul.mubr.f32.gmra.mrb[0].mxu0 %v1292
  %v1774 = vpop.f32.mrb[0].mxu0
  %v1775 = vadd.f32 %v1371, %v1774
  %v1776 = vpop.f32.mrb[0].mxu0
  %1777 = vmatprep.mubr.f32.mxu0 0.0
  %1778 = vmatmul.mubr.f32.gmra.mrb[0].mxu0 %v1293
  %v1779 = vpop.f32.mrb[0].mxu0
  %v1780 = vadd.f32 %v1371, %v1779
  %v1781 = vpop.f32.mrb[0].mxu0
  %1782 = vmatprep.mubr.f32.mxu0 0.0
  %1783 = vmatmul.mubr.f32.gmra.mrb[0].mxu0 %v1294
  %v1784 = vpop.f32.mrb[0].mxu0
  %v1785 = vadd.f32 %v1371, %v1784
  %v1786 = vpop.f32.mrb[0].mxu0
  %1787 = vmatprep.mubr.f32.mxu0 0.0
  %1788 = vmatmul.mubr.f32.gmra.mrb[0].mxu0 %v1295
  %v1789 = vpop.f32.mrb[0].mxu0
  %v1790 = vadd.f32 %v1371, %v1789
  %v1791 = vpop.f32.mrb[0].mxu0
  %1792 = vmatprep.mubr.f32.mxu0 0.0
  %1793 = vmatmul.mubr.f32.gmra.mrb[0].mxu0 %v1296
  %v1794 = vpop.f32.mrb[0].mxu0
  %v1795 = vadd.f32 %v1371, %v1794
  %v1796 = vpop.f32.mrb[0].mxu0
  %1797 = vmatprep.mubr.f32.mxu0 0.0
  %1798 = vmatmul.mubr.f32.gmra.mrb[0].mxu0 %v1297
  %v1799 = vpop.f32.mrb[0].mxu0
  %v1800 = vadd.f32 %v1371, %v1799
  %v1801 = vpop.f32.mrb[0].mxu0
  %1802 = vmatprep.mubr.f32.mxu0 0.0
  %1803 = vmatmul.mubr.f32.gmra.mrb[0].mxu0 %v1298
  %v1804 = vpop.f32.mrb[0].mxu0
  %v1805 = vadd.f32 %v1371, %v1804
  %v1806 = vpop.f32.mrb[0].mxu0
  %1807 = vmatprep.mubr.f32.mxu0 0.0
  %1808 = vmatmul.mubr.f32.gmra.mrb[0].mxu0 %v1299
  %v1809 = vpop.f32.mrb[0].mxu0
  %v1810 = vadd.f32 %v1371, %v1809
  %v1811 = vpop.f32.mrb[0].mxu0
  %1812 = vmatprep.mubr.f32.mxu0 0.0
  %1813 = vmatmul.mubr.f32.gmra.mrb[0].mxu0 %v1300
  %v1814 = vpop.f32.mrb[0].mxu0
  %v1815 = vadd.f32 %v1371, %v1814
  %v1816 = vpop.f32.mrb[0].mxu0
  %1817 = vmatprep.mubr.f32.mxu0 0.0
  %1818 = vmatmul.mubr.f32.gmra.mrb[0].mxu0 %v1301
  %v1819 = vpop.f32.mrb[0].mxu0
  %v1820 = vadd.f32 %v1371, %v1819
  %v1821 = vpop.f32.mrb[0].mxu0
  %1822 = vmatprep.mubr.f32.mxu0 0.0
  %1823 = vmatmul.mubr.f32.gmra.mrb[0].mxu0 %v1302
  %v1824 = vpop.f32.mrb[0].mxu0
  %v1825 = vadd.f32 %v1371, %v1824
  %v1826 = vpop.f32.mrb[0].mxu0
  %1827 = vmatprep.mubr.f32.mxu0 0.0
  %1828 = vmatmul.mubr.f32.gmra.mrb[0].mxu0 %v1303
  %v1829 = vpop.f32.mrb[0].mxu0
  %v1830 = vadd.f32 %v1371, %v1829
  %v1831 = vpop.f32.mrb[0].mxu0
  %1832 = vmatprep.mubr.f32.mxu0 0.0
  %1833 = vmatmul.mubr.f32.gmra.mrb[0].mxu0 %v1304
  %v1834 = vpop.f32.mrb[0].mxu0
  %v1835 = vadd.f32 %v1371, %v1834
  %v1836 = vpop.f32.mrb[0].mxu0
  %1837 = vmatprep.mubr.f32.mxu0 0.0
  %1838 = vmatmul.mubr.f32.gmra.mrb[0].mxu0 %v1305
  %v1839 = vpop.f32.mrb[0].mxu0
  %v1840 = vadd.f32 %v1371, %v1839
  %v1841 = vpop.f32.mrb[0].mxu0
  %1842 = vmatprep.mubr.f32.mxu0 0.0
  %1843 = vmatmul.mubr.f32.gmra.mrb[0].mxu0 %v1306
  %v1844 = vpop.f32.mrb[0].mxu0
  %v1845 = vadd.f32 %v1371, %v1844
  %v1846 = vpop.f32.mrb[0].mxu0
  %1847 = vmatprep.mubr.f32.mxu0 0.0
  %1848 = vmatmul.mubr.f32.gmra.mrb[0].mxu0 %v1307
  %v1849 = vpop.f32.mrb[0].mxu0
  %v1850 = vadd.f32 %v1371, %v1849
  %v1851 = vpop.f32.mrb[0].mxu0
  %1852 = vmatprep.mubr.f32.mxu0 0.0
  %1853 = vmatmul.mubr.f32.gmra.mrb[0].mxu0 %v1308
  %v1854 = vpop.f32.mrb[0].mxu0
  %v1855 = vadd.f32 %v1371, %v1854
  %v1856 = vpop.f32.mrb[0].mxu0
  %1857 = vmatprep.mubr.f32.mxu0 0.0
  %1858 = vmatmul.mubr.f32.gmra.mrb[0].mxu0 %v1309
  %v1859 = vpop.f32.mrb[0].mxu0
  %v1860 = vadd.f32 %v1371, %v1859
  %v1861 = vpop.f32.mrb[0].mxu0
  %1862 = vmatprep.mubr.f32.mxu0 0.0
  %1863 = vmatmul.mubr.f32.gmra.mrb[0].mxu0 %v1310
  %v1864 = vpop.f32.mrb[0].mxu0
  %v1865 = vadd.f32 %v1371, %v1864
  %v1866 = vpop.f32.mrb[0].mxu0
  %1867 = vmatprep.mubr.f32.mxu0 0.0
  %1868 = vmatmul.mubr.f32.gmra.mrb[0].mxu0 %v1311
  %v1869 = vpop.f32.mrb[0].mxu0
  %v1870 = vadd.f32 %v1371, %v1869
  %v1871 = vpop.f32.mrb[0].mxu0
  %1872 = vmatprep.mubr.f32.mxu0 0.0
  %1873 = vmatmul.mubr.f32.gmra.mrb[0].mxu0 %v1312
  %v1874 = vpop.f32.mrb[0].mxu0
  %v1875 = vadd.f32 %v1371, %v1874
  %v1876 = vpop.f32.mrb[0].mxu0
  %1877 = vmatprep.mubr.f32.mxu0 0.0
  %1878 = vmatmul.mubr.f32.gmra.mrb[0].mxu0 %v1313
  %v1879 = vpop.f32.mrb[0].mxu0
  %v1880 = vadd.f32 %v1371, %v1879
  %v1881 = vpop.f32.mrb[0].mxu0
  %1882 = vmatprep.mubr.f32.mxu0 0.0
  %1883 = vmatmul.mubr.f32.gmra.mrb[0].mxu0 %v1314
  %v1884 = vpop.f32.mrb[0].mxu0
  %v1885 = vadd.f32 %v1371, %v1884
  %v1886 = vpop.f32.mrb[0].mxu0
  %1887 = vmatprep.mubr.f32.mxu0 0.0
  %1888 = vmatmul.mubr.f32.gmra.mrb[0].mxu0 %v1315
  %v1889 = vpop.f32.mrb[0].mxu0
  %v1890 = vadd.f32 %v1371, %v1889
  %v1891 = vpop.f32.mrb[0].mxu0
  %1892 = vmatprep.mubr.f32.mxu0 0.0
  %1893 = vmatmul.mubr.f32.gmra.mrb[0].mxu0 %v1316
  %v1894 = vpop.f32.mrb[0].mxu0
  %v1895 = vadd.f32 %v1371, %v1894
  %v1896 = vpop.f32.mrb[0].mxu0
  %1897 = vmatprep.mubr.f32.mxu0 0.0
  %1898 = vmatmul.mubr.f32.gmra.mrb[0].mxu0 %v1317
  %v1899 = vpop.f32.mrb[0].mxu0
  %v1900 = vadd.f32 %v1371, %v1899
  %v1901 = vpop.f32.mrb[0].mxu0
  %1902 = vmatprep.mubr.f32.mxu0 0.0
  %1903 = vmatmul.mubr.f32.gmra.mrb[0].mxu0 %v1318
  %v1904 = vpop.f32.mrb[0].mxu0
  %v1905 = vadd.f32 %v1371, %v1904
  %v1906 = vpop.f32.mrb[0].mxu0
  %1907 = vmatprep.mubr.f32.mxu0 0.0
  %1908 = vmatmul.mubr.f32.gmra.mrb[0].mxu0 %v1319
  %v1909 = vpop.f32.mrb[0].mxu0
  %v1910 = vadd.f32 %v1371, %v1909
  %v1911 = vpop.f32.mrb[0].mxu0
  %1912 = vmatprep.mubr.f32.mxu0 0.0
  %1913 = vmatmul.mubr.f32.gmra.mrb[0].mxu0 %v1320
  %v1914 = vpop.f32.mrb[0].mxu0
  %v1915 = vadd.f32 %v1371, %v1914
  %v1916 = vpop.f32.mrb[0].mxu0
  %1917 = vmatprep.mubr.f32.mxu0 0.0
  %1918 = vmatmul.mubr.f32.gmra.mrb[0].mxu0 %v1321
  %v1919 = vpop.f32.mrb[0].mxu0
  %v1920 = vadd.f32 %v1371, %v1919
  %v1921 = vpop.f32.mrb[0].mxu0
  %1922 = vmatprep.mubr.f32.mxu0 0.0
  %1923 = vmatmul.mubr.f32.gmra.mrb[0].mxu0 %v1322
  %v1924 = vpop.f32.mrb[0].mxu0
  %v1925 = vadd.f32 %v1371, %v1924
  %v1926 = vpop.f32.mrb[0].mxu0
  %1927 = vmatprep.mubr.f32.mxu0 0.0
  %1928 = vmatmul.mubr.f32.gmra.mrb[0].mxu0 %v1323
  %v1929 = vpop.f32.mrb[0].mxu0
  %v1930 = vadd.f32 %v1371, %v1929
  %v1931 = vpop.f32.mrb[0].mxu0
  %1932 = vmatprep.mubr.f32.mxu0 0.0
  %1933 = vmatmul.mubr.f32.gmra.mrb[0].mxu0 %v1324
  %v1934 = vpop.f32.mrb[0].mxu0
  %v1935 = vadd.f32 %v1371, %v1934
  %v1936 = vpop.f32.mrb[0].mxu0
  %1937 = vmatprep.mubr.f32.mxu0 0.0
  %1938 = vmatmul.mubr.f32.gmra.mrb[0].mxu0 %v1325
  %v1939 = vpop.f32.mrb[0].mxu0
  %v1940 = vadd.f32 %v1371, %v1939
  %v1941 = vpop.f32.mrb[0].mxu0
  %1942 = vmatprep.mubr.f32.mxu0 0.0
  %1943 = vmatmul.mubr.f32.gmra.mrb[0].mxu0 %v1326
  %v1944 = vpop.f32.mrb[0].mxu0
  %v1945 = vadd.f32 %v1371, %v1944
  %v1946 = vpop.f32.mrb[0].mxu0
  %1947 = vmatprep.mubr.f32.mxu0 0.0
  %1948 = vmatmul.mubr.f32.gmra.mrb[0].mxu0 %v1327
  %v1949 = vpop.f32.mrb[0].mxu0
  %v1950 = vadd.f32 %v1371, %v1949
  %v1951 = vpop.f32.mrb[0].mxu0
  %1952 = vmatprep.mubr.f32.mxu0 0.0
  %1953 = vmatmul.mubr.f32.gmra.mrb[0].mxu0 %v1328
  %v1954 = vpop.f32.mrb[0].mxu0
  %v1955 = vadd.f32 %v1371, %v1954
  %v1956 = vpop.f32.mrb[0].mxu0
  %1957 = vmatprep.mubr.f32.mxu0 0.0
  %1958 = vmatmul.mubr.f32.gmra.mrb[0].mxu0 %v1329
  %v1959 = vpop.f32.mrb[0].mxu0
  %v1960 = vadd.f32 %v1371, %v1959
  %v1961 = vpop.f32.mrb[0].mxu0
  %1962 = vmatprep.mubr.f32.mxu0 0.0
  %1963 = vmatmul.mubr.f32.gmra.mrb[0].mxu0 %v1330
  %v1964 = vpop.f32.mrb[0].mxu0
  %v1965 = vadd.f32 %v1371, %v1964
  %v1966 = vpop.f32.mrb[0].mxu0
  %1967 = vmatprep.mubr.f32.mxu0 0.0
  %1968 = vmatmul.mubr.f32.gmra.mrb[0].mxu0 %v1331
  %v1969 = vpop.f32.mrb[0].mxu0
  %v1970 = vadd.f32 %v1371, %v1969
  %v1971 = vpop.f32.mrb[0].mxu0
  %1972 = vmatprep.mubr.f32.mxu0 0.0
  %1973 = vmatmul.mubr.f32.gmra.mrb[0].mxu0 %v1332
  %v1974 = vpop.f32.mrb[0].mxu0
  %v1975 = vadd.f32 %v1371, %v1974
  %v1976 = vpop.f32.mrb[0].mxu0
  %1977 = vmatprep.mubr.f32.mxu0 0.0
  %1978 = vmatmul.mubr.f32.gmra.mrb[0].mxu0 %v1333
  %v1979 = vpop.f32.mrb[0].mxu0
  %v1980 = vadd.f32 %v1371, %v1979
  %v1981 = vpop.f32.mrb[0].mxu0
  %1982 = vmatprep.mubr.f32.mxu0 0.0
  %1983 = vmatmul.mubr.f32.gmra.mrb[0].mxu0 %v1334
  %v1984 = vpop.f32.mrb[0].mxu0
  %v1985 = vadd.f32 %v1371, %v1984
  %v1986 = vpop.f32.mrb[0].mxu0
  %1987 = vmatprep.mubr.f32.mxu0 0.0
  %1988 = vmatmul.mubr.f32.gmra.mrb[0].mxu0 %v1335
  %v1989 = vpop.f32.mrb[0].mxu0
  %v1990 = vadd.f32 %v1371, %v1989
  %v1991 = vpop.f32.mrb[0].mxu0
  %1992 = vmatprep.mubr.f32.mxu0 0.0
  %1993 = vmatmul.mubr.f32.gmra.mrb[0].mxu0 %v1336
  %v1994 = vpop.f32.mrb[0].mxu0
  %v1995 = vadd.f32 %v1371, %v1994
  %v1996 = vpop.f32.mrb[0].mxu0
  %1997 = vmatprep.mubr.f32.mxu0 0.0
  %1998 = vmatmul.mubr.f32.gmra.mrb[0].mxu0 %v1337
  %v1999 = vpop.f32.mrb[0].mxu0
  %v2000 = vadd.f32 %v1371, %v1999
  %v2001 = vpop.f32.mrb[0].mxu0
  %2002 = vmatprep.mubr.f32.mxu0 0.0
  %2003 = vmatmul.mubr.f32.gmra.mrb[0].mxu0 %v1338
  %v2004 = vpop.f32.mrb[0].mxu0
  %v2005 = vadd.f32 %v1371, %v2004
  %v2006 = vpop.f32.mrb[0].mxu0
  %2007 = vmatprep.mubr.f32.mxu0 0.0
  %2008 = vmatmul.mubr.f32.gmra.mrb[0].mxu0 %v1339
  %v2009 = vpop.f32.mrb[0].mxu0
  %v2010 = vadd.f32 %v1371, %v2009
  %v2011 = vpop.f32.mrb[0].mxu0
  %2012 = vmatprep.mubr.f32.mxu0 0.0
  %2013 = vmatmul.mubr.f32.gmra.mrb[0].mxu0 %v1340
  %v2014 = vpop.f32.mrb[0].mxu0
  %v2015 = vadd.f32 %v1371, %v2014
  %v2016 = vpop.f32.mrb[0].mxu0
  %2017 = vmatprep.mubr.f32.mxu0 0.0
  %2018 = vmatmul.mubr.f32.gmra.mrb[0].mxu0 %v1341
  %v2019 = vpop.f32.mrb[0].mxu0
  %v2020 = vadd.f32 %v1371, %v2019
  %v2021 = vpop.f32.mrb[0].mxu0
  %2022 = vmatprep.mubr.f32.mxu0 0.0
  %2023 = vmatmul.mubr.f32.gmra.mrb[0].mxu0 %v1342
  %v2024 = vpop.f32.mrb[0].mxu0
  %v2025 = vadd.f32 %v1371, %v2024
  %v2026 = vpop.f32.mrb[0].mxu0
  %2027 = vmatprep.mubr.f32.mxu0 0.0
  %2028 = vmatmul.mubr.f32.gmra.mrb[0].mxu0 %v1343
  %v2029 = vpop.f32.mrb[0].mxu0
  %v2030 = vadd.f32 %v1371, %v2029
  %v2031 = vpop.f32.mrb[0].mxu0
  %2032 = vmatprep.mubr.f32.mxu0 0.0
  %2033 = vmatmul.mubr.f32.gmra.mrb[0].mxu0 %v1344
  %v2034 = vpop.f32.mrb[0].mxu0
  %v2035 = vadd.f32 %v1371, %v2034
  %v2036 = vpop.f32.mrb[0].mxu0
  %2037 = vmatprep.mubr.f32.mxu0 0.0
  %2038 = vmatmul.mubr.f32.gmra.mrb[0].mxu0 %v1345
  %v2039 = vpop.f32.mrb[0].mxu0
  %v2040 = vadd.f32 %v1371, %v2039
  %v2041 = vpop.f32.mrb[0].mxu0
  %2042 = vmatprep.mubr.f32.mxu0 0.0
  %2043 = vmatmul.mubr.f32.gmra.mrb[0].mxu0 %v1346
  %v2044 = vpop.f32.mrb[0].mxu0
  %v2045 = vadd.f32 %v1371, %v2044
  %v2046 = vpop.f32.mrb[0].mxu0
  %2047 = vmatprep.mubr.f32.mxu0 0.0
  %2048 = vmatmul.mubr.f32.gmra.mrb[0].mxu0 %v1347
  %v2049 = vpop.f32.mrb[0].mxu0
  %v2050 = vadd.f32 %v1371, %v2049
  %v2051 = vpop.f32.mrb[0].mxu0
  %2052 = vmatprep.mubr.f32.mxu0 0.0
  %2053 = vmatmul.mubr.f32.gmra.mrb[0].mxu0 %v1348
  %v2054 = vpop.f32.mrb[0].mxu0
  %v2055 = vadd.f32 %v1371, %v2054
  %v2056 = vpop.f32.mrb[0].mxu0
  %2057 = vmatprep.mubr.f32.mxu0 0.0
  %2058 = vmatmul.mubr.f32.gmra.mrb[0].mxu0 %v1349
  %v2059 = vpop.f32.mrb[0].mxu0
  %v2060 = vadd.f32 %v1371, %v2059
  %v2061 = vpop.f32.mrb[0].mxu0
  %2062 = vdwg.mxu0
  %vm2063 = vcmask 7168
  %2064 = vst.msk [vmem:[%s5] sm:$0xff] %vm2063, %v1440
  %2065 = vst.msk [vmem:[%s5 + $0x8] sm:$0xff] %vm2063, %v1445
  %2066 = vst.msk [vmem:[%s5 + $0x10] sm:$0xff] %vm2063, %v1450
  %2067 = vst.msk [vmem:[%s5 + $0x18] sm:$0xff] %vm2063, %v1455
  %2068 = vst.msk [vmem:[%s5 + $0x20] sm:$0xff] %vm2063, %v1460
  %2069 = vst.msk [vmem:[%s5 + $0x28] sm:$0xff] %vm2063, %v1465
  %2070 = vst.msk [vmem:[%s5 + $0x30] sm:$0xff] %vm2063, %v1470
  %2071 = vst.msk [vmem:[%s5 + $0x38] sm:$0xff] %vm2063, %v1475
  %2072 = vst.msk [vmem:[%s5 + $0x40] sm:$0xff] %vm2063, %v1480
  %2073 = vst.msk [vmem:[%s5 + $0x48] sm:$0xff] %vm2063, %v1485
  %2074 = vst.msk [vmem:[%s5 + $0x50] sm:$0xff] %vm2063, %v1490
  %2075 = vst.msk [vmem:[%s5 + $0x58] sm:$0xff] %vm2063, %v1495
  %2076 = vst.msk [vmem:[%s5 + $0x60] sm:$0xff] %vm2063, %v1500
  %2077 = vst.msk [vmem:[%s5 + $0x68] sm:$0xff] %vm2063, %v1505
  %2078 = vst.msk [vmem:[%s5 + $0x70] sm:$0xff] %vm2063, %v1510
  %2079 = vst.msk [vmem:[%s5 + $0x78] sm:$0xff] %vm2063, %v1515
  %2080 = vst.msk [vmem:[%s5 + $0x80] sm:$0xff] %vm2063, %v1520
  %2081 = vst.msk [vmem:[%s5 + $0x88] sm:$0xff] %vm2063, %v1525
  %2082 = vst.msk [vmem:[%s5 + $0x90] sm:$0xff] %vm2063, %v1530
  %2083 = vst.msk [vmem:[%s5 + $0x98] sm:$0xff] %vm2063, %v1535
  %2084 = vst.msk [vmem:[%s5 + $0xa0] sm:$0xff] %vm2063, %v1540
  %2085 = vst.msk [vmem:[%s5 + $0xa8] sm:$0xff] %vm2063, %v1545
  %2086 = vst.msk [vmem:[%s5 + $0xb0] sm:$0xff] %vm2063, %v1550
  %2087 = vst.msk [vmem:[%s5 + $0xb8] sm:$0xff] %vm2063, %v1555
  %2088 = vst.msk [vmem:[%s5 + $0xc0] sm:$0xff] %vm2063, %v1560
  %2089 = vst.msk [vmem:[%s5 + $0xc8] sm:$0xff] %vm2063, %v1565
  %2090 = vst.msk [vmem:[%s5 + $0xd0] sm:$0xff] %vm2063, %v1570
  %2091 = vst.msk [vmem:[%s5 + $0xd8] sm:$0xff] %vm2063, %v1575
  %2092 = vst.msk [vmem:[%s5 + $0xe0] sm:$0xff] %vm2063, %v1580
  %2093 = vst.msk [vmem:[%s5 + $0xe8] sm:$0xff] %vm2063, %v1585
  %2094 = vst.msk [vmem:[%s5 + $0xf0] sm:$0xff] %vm2063, %v1590
  %2095 = vst.msk [vmem:[%s5 + $0xf8] sm:$0xff] %vm2063, %v1595
  %2096 = vst.msk [vmem:[%s5 + $0x100] sm:$0xff] %vm2063, %v1600
  %2097 = vst.msk [vmem:[%s5 + $0x108] sm:$0xff] %vm2063, %v1605
  %2098 = vst.msk [vmem:[%s5 + $0x110] sm:$0xff] %vm2063, %v1610
  %2099 = vst.msk [vmem:[%s5 + $0x118] sm:$0xff] %vm2063, %v1615
  %2100 = vst.msk [vmem:[%s5 + $0x120] sm:$0xff] %vm2063, %v1620
  %2101 = vst.msk [vmem:[%s5 + $0x128] sm:$0xff] %vm2063, %v1625
  %2102 = vst.msk [vmem:[%s5 + $0x130] sm:$0xff] %vm2063, %v1630
  %2103 = vst.msk [vmem:[%s5 + $0x138] sm:$0xff] %vm2063, %v1635
  %2104 = vst.msk [vmem:[%s5 + $0x140] sm:$0xff] %vm2063, %v1640
  %2105 = vst.msk [vmem:[%s5 + $0x148] sm:$0xff] %vm2063, %v1645
  %2106 = vst.msk [vmem:[%s5 + $0x150] sm:$0xff] %vm2063, %v1650
  %2107 = vst.msk [vmem:[%s5 + $0x158] sm:$0xff] %vm2063, %v1655
  %2108 = vst.msk [vmem:[%s5 + $0x160] sm:$0xff] %vm2063, %v1660
  %2109 = vst.msk [vmem:[%s5 + $0x168] sm:$0xff] %vm2063, %v1665
  %2110 = vst.msk [vmem:[%s5 + $0x170] sm:$0xff] %vm2063, %v1670
  %2111 = vst.msk [vmem:[%s5 + $0x178] sm:$0xff] %vm2063, %v1675
  %2112 = vst.msk [vmem:[%s5 + $0x180] sm:$0xff] %vm2063, %v1680
  %2113 = vst.msk [vmem:[%s5 + $0x188] sm:$0xff] %vm2063, %v1685
  %2114 = vst.msk [vmem:[%s5 + $0x190] sm:$0xff] %vm2063, %v1690
  %2115 = vst.msk [vmem:[%s5 + $0x198] sm:$0xff] %vm2063, %v1695
  %2116 = vst.msk [vmem:[%s5 + $0x1a0] sm:$0xff] %vm2063, %v1700
  %2117 = vst.msk [vmem:[%s5 + $0x1a8] sm:$0xff] %vm2063, %v1705
  %2118 = vst.msk [vmem:[%s5 + $0x1b0] sm:$0xff] %vm2063, %v1710
  %2119 = vst.msk [vmem:[%s5 + $0x1b8] sm:$0xff] %vm2063, %v1715
  %2120 = vst.msk [vmem:[%s5 + $0x1c0] sm:$0xff] %vm2063, %v1720
  %2121 = vst.msk [vmem:[%s5 + $0x1c8] sm:$0xff] %vm2063, %v1725
  %2122 = vst.msk [vmem:[%s5 + $0x1d0] sm:$0xff] %vm2063, %v1730
  %2123 = vst.msk [vmem:[%s5 + $0x1d8] sm:$0xff] %vm2063, %v1735
  %2124 = vst.msk [vmem:[%s5 + $0x1e0] sm:$0xff] %vm2063, %v1740
  %2125 = vst.msk [vmem:[%s5 + $0x1e8] sm:$0xff] %vm2063, %v1745
  %2126 = vst.msk [vmem:[%s5 + $0x1f0] sm:$0xff] %vm2063, %v1750
  %2127 = vst.msk [vmem:[%s5 + $0x1f8] sm:$0xff] %vm2063, %v1755
  %2128 = vst.msk [vmem:[%s5 + $0x200] sm:$0xff] %vm2063, %v1760
  %2129 = vst.msk [vmem:[%s5 + $0x208] sm:$0xff] %vm2063, %v1765
  %2130 = vst.msk [vmem:[%s5 + $0x210] sm:$0xff] %vm2063, %v1770
  %2131 = vst.msk [vmem:[%s5 + $0x218] sm:$0xff] %vm2063, %v1775
  %2132 = vst.msk [vmem:[%s5 + $0x220] sm:$0xff] %vm2063, %v1780
  %2133 = vst.msk [vmem:[%s5 + $0x228] sm:$0xff] %vm2063, %v1785
  %2134 = vst.msk [vmem:[%s5 + $0x230] sm:$0xff] %vm2063, %v1790
  %2135 = vst.msk [vmem:[%s5 + $0x238] sm:$0xff] %vm2063, %v1795
  %2136 = vst.msk [vmem:[%s5 + $0x240] sm:$0xff] %vm2063, %v1800
  %2137 = vst.msk [vmem:[%s5 + $0x248] sm:$0xff] %vm2063, %v1805
  %2138 = vst.msk [vmem:[%s5 + $0x250] sm:$0xff] %vm2063, %v1810
  %2139 = vst.msk [vmem:[%s5 + $0x258] sm:$0xff] %vm2063, %v1815
  %2140 = vst.msk [vmem:[%s5 + $0x260] sm:$0xff] %vm2063, %v1820
  %2141 = vst.msk [vmem:[%s5 + $0x268] sm:$0xff] %vm2063, %v1825
  %2142 = vst.msk [vmem:[%s5 + $0x270] sm:$0xff] %vm2063, %v1830
  %2143 = vst.msk [vmem:[%s5 + $0x278] sm:$0xff] %vm2063, %v1835
  %2144 = vst.msk [vmem:[%s5 + $0x280] sm:$0xff] %vm2063, %v1840
  %2145 = vst.msk [vmem:[%s5 + $0x288] sm:$0xff] %vm2063, %v1845
  %2146 = vst.msk [vmem:[%s5 + $0x290] sm:$0xff] %vm2063, %v1850
  %2147 = vst.msk [vmem:[%s5 + $0x298] sm:$0xff] %vm2063, %v1855
  %2148 = vst.msk [vmem:[%s5 + $0x2a0] sm:$0xff] %vm2063, %v1860
  %2149 = vst.msk [vmem:[%s5 + $0x2a8] sm:$0xff] %vm2063, %v1865
  %2150 = vst.msk [vmem:[%s5 + $0x2b0] sm:$0xff] %vm2063, %v1870
  %2151 = vst.msk [vmem:[%s5 + $0x2b8] sm:$0xff] %vm2063, %v1875
  %2152 = vst.msk [vmem:[%s5 + $0x2c0] sm:$0xff] %vm2063, %v1880
  %2153 = vst.msk [vmem:[%s5 + $0x2c8] sm:$0xff] %vm2063, %v1885
  %2154 = vst.msk [vmem:[%s5 + $0x2d0] sm:$0xff] %vm2063, %v1890
  %2155 = vst.msk [vmem:[%s5 + $0x2d8] sm:$0xff] %vm2063, %v1895
  %2156 = vst.msk [vmem:[%s5 + $0x2e0] sm:$0xff] %vm2063, %v1900
  %2157 = vst.msk [vmem:[%s5 + $0x2e8] sm:$0xff] %vm2063, %v1905
  %2158 = vst.msk [vmem:[%s5 + $0x2f0] sm:$0xff] %vm2063, %v1910
  %2159 = vst.msk [vmem:[%s5 + $0x2f8] sm:$0xff] %vm2063, %v1915
  %2160 = vst.msk [vmem:[%s5 + $0x300] sm:$0xff] %vm2063, %v1920
  %2161 = vst.msk [vmem:[%s5 + $0x308] sm:$0xff] %vm2063, %v1925
  %2162 = vst.msk [vmem:[%s5 + $0x310] sm:$0xff] %vm2063, %v1930
  %2163 = vst.msk [vmem:[%s5 + $0x318] sm:$0xff] %vm2063, %v1935
  %2164 = vst.msk [vmem:[%s5 + $0x320] sm:$0xff] %vm2063, %v1940
  %2165 = vst.msk [vmem:[%s5 + $0x328] sm:$0xff] %vm2063, %v1945
  %2166 = vst.msk [vmem:[%s5 + $0x330] sm:$0xff] %vm2063, %v1950
  %2167 = vst.msk [vmem:[%s5 + $0x338] sm:$0xff] %vm2063, %v1955
  %2168 = vst.msk [vmem:[%s5 + $0x340] sm:$0xff] %vm2063, %v1960
  %2169 = vst.msk [vmem:[%s5 + $0x348] sm:$0xff] %vm2063, %v1965
  %2170 = vst.msk [vmem:[%s5 + $0x350] sm:$0xff] %vm2063, %v1970
  %2171 = vst.msk [vmem:[%s5 + $0x358] sm:$0xff] %vm2063, %v1975
  %2172 = vst.msk [vmem:[%s5 + $0x360] sm:$0xff] %vm2063, %v1980
  %2173 = vst.msk [vmem:[%s5 + $0x368] sm:$0xff] %vm2063, %v1985
  %2174 = vst.msk [vmem:[%s5 + $0x370] sm:$0xff] %vm2063, %v1990
  %2175 = vst.msk [vmem:[%s5 + $0x378] sm:$0xff] %vm2063, %v1995
  %2176 = vst.msk [vmem:[%s5 + $0x380] sm:$0xff] %vm2063, %v2000
  %2177 = vst.msk [vmem:[%s5 + $0x388] sm:$0xff] %vm2063, %v2005
  %2178 = vst.msk [vmem:[%s5 + $0x390] sm:$0xff] %vm2063, %v2010
  %2179 = vst.msk [vmem:[%s5 + $0x398] sm:$0xff] %vm2063, %v2015
  %2180 = vst.msk [vmem:[%s5 + $0x3a0] sm:$0xff] %vm2063, %v2020
  %2181 = vst.msk [vmem:[%s5 + $0x3a8] sm:$0xff] %vm2063, %v2025
  %2182 = vst.msk [vmem:[%s5 + $0x3b0] sm:$0xff] %vm2063, %v2030
  %2183 = vst.msk [vmem:[%s5 + $0x3b8] sm:$0xff] %vm2063, %v2035
  %2184 = vst.msk [vmem:[%s5 + $0x3c0] sm:$0xff] %vm2063, %v2040
  %2185 = vst.msk [vmem:[%s5 + $0x3c8] sm:$0xff] %vm2063, %v2045
  %2186 = vst.msk [vmem:[%s5 + $0x3d0] sm:$0xff] %vm2063, %v2050
  %2187 = vst.msk [vmem:[%s5 + $0x3d8] sm:$0xff] %vm2063, %v2055
  %2188 = vst.msk [vmem:[%s5 + $0x3e0] sm:$0xff] %vm2063, %v2060
  // Predicated region
  $region22: #{tpu_custom_call.1} parent=0 // pred_check
    _
  $region23: #{tpu_custom_call.1} parent=0 // pred_check_branch
    %2190 = sbr.rel (0) target = $region25
  $region24: #{tpu_custom_call.1} parent=0 // pred_region
    _
  $region25: #{tpu_custom_call.1} parent=0 // pred_fallthru
    _
  // Predicated region
  $region26: #{tpu_custom_call.1} parent=0 // pred_check
    _
  $region27: #{tpu_custom_call.1} parent=0 // pred_check_branch
    %2192 = sbr.rel (0) target = $region29
  $region28: #{tpu_custom_call.1} parent=0 // pred_region
    _
  $region29: #{tpu_custom_call.1} parent=0 // pred_fallthru
    _

</llo_original>
